<compile_context>
chip_gen: v5e
topology: v5e:2x2
jax: 0.10.0
libtpu: 0.0.40
codegen_flags: <defaults>
</compile_context>

<pallas_src>
import functools
import math

import jax
import jax.numpy as jnp
from jax.experimental import pallas as pl
from jax.experimental.pallas import tpu as pltpu


# ----------------------------- config ---------------------------------------
class Config:
    vocab_size = 256
    embed_dim = 64
    intermediate_dim = 128
    num_q_heads = 4
    num_kv_heads = 2
    num_layers = 2
    max_position_embeddings = 64
    base_theta = 10000.0
    eos_token_id = 0
    attn_dropout = 0.0          # nn.Dropout(0.0) is the identity
    dtype = jnp.float32


CFG = Config()
HEAD_DIM = CFG.embed_dim // CFG.num_q_heads           # 16
GQA_GROUP = CFG.num_q_heads // CFG.num_kv_heads       # 2
DQ = CFG.num_q_heads * HEAD_DIM                       # 64  q columns
DK = CFG.num_kv_heads * HEAD_DIM                      # 32  k columns
DV = CFG.num_kv_heads * HEAD_DIM                      # 32  v columns
QKV_HALF = DQ + DK + DV                               # 128 (lane-aligned)
RMS_EPS = 1e-5
MATMUL_DTYPE = jnp.bfloat16                           # MXU operand dtype (v6e/v7x native)


# ----------------------------- rope tables (glue, constant-folds under jit) --
def precompute_rope(head_dim, base_theta, context_length):
    k = jnp.arange(0, head_dim, 2)[: head_dim // 2].astype(jnp.float32)
    inv_freq = 1.0 / (base_theta ** (k / head_dim))
    positions = jnp.arange(context_length, dtype=jnp.float32)
    angles = positions[:, None] * inv_freq[None, :]
    angles = jnp.concatenate([angles, angles], axis=-1)
    return jnp.cos(angles), jnp.sin(angles)


def build_rope_tables(batch, seq):
    """(B*S, 128) cos / sign-folded-sin tables matching the packed qkv layout:
    cols [0:DQ) q heads, [DQ:DQ+DK) k heads, [DQ+DK:) v pass-through."""
    cos_full, sin_full = precompute_rope(HEAD_DIM, CFG.base_theta,
                                         CFG.max_position_embeddings)
    cos = cos_full[:seq]                      # (S, hd)
    sin = sin_full[:seq]
    half = HEAD_DIM // 2
    # rotate_half(x) = swap_halves(x) * [-1 | +1]  ->  fold the sign into sin.
    sin_signed = jnp.concatenate([-sin[:, :half], sin[:, half:]], axis=-1)
    cos_row = jnp.concatenate(
        [jnp.tile(cos, (1, CFG.num_q_heads)),
         jnp.tile(cos, (1, CFG.num_kv_heads)),
         jnp.ones((seq, DV), jnp.float32)], axis=-1)      # (S, 128)
    sin_row = jnp.concatenate(
        [jnp.tile(sin_signed, (1, CFG.num_q_heads)),
         jnp.tile(sin_signed, (1, CFG.num_kv_heads)),
         jnp.zeros((seq, DV), jnp.float32)], axis=-1)     # (S, 128)
    return jnp.tile(cos_row, (batch, 1)), jnp.tile(sin_row, (batch, 1))


# ----------------------------- kernel helpers --------------------------------
def _rmsnorm(x, w):
    # x: (R, D) f32, w: (1, D) f32
    mean = jnp.mean(x * x, axis=-1, keepdims=True)
    return x * jax.lax.rsqrt(mean + RMS_EPS) * w


# ----------------------------- fused model kernel ----------------------------
def llama_fused_kernel(x_ref, ln1_ref, ln2_ref, wqkv_ref, wo_ref, wgu_ref,
                       wd_ref, fln_ref, embt_ref, cos_ref, sin_ref,
                       o_ref, attn_scr, *, batch, seq):
    I = CFG.intermediate_dim
    hd = HEAD_DIM

    x = x_ref[...]                   # (R, D) f32 residual stream, R = batch*seq
    cos_tbl = cos_ref[...]           # (R, 128) f32
    sin_tbl = sin_ref[...]           # (R, 128) f32

    # Additive causal bias (0 / -1e9), built once and shared by all
    # layers / heads (a single select total; per-head it is just a VPU add).
    row = jax.lax.broadcasted_iota(jnp.int32, (batch, seq, seq), 1)
    col = jax.lax.broadcasted_iota(jnp.int32, (batch, seq, seq), 2)
    bias = jnp.where(col > row, jnp.float32(-1e9), jnp.float32(0.0))

    # TODO(synk): switch to lax.fori_loop with dynamic layer indexing of the
    # stacked (L, ...) weight refs once num_layers grows beyond a few.
    for li in range(CFG.num_layers):
        # ---------------- attention block ----------------
        h = _rmsnorm(x, ln1_ref[li])
        # Fused projection emits [q | k | v | swap(q) | swap(k) | 0]; the
        # rotate-half permutation lives in the weight, so RoPE below is just
        # two full-width VPU FMAs (no per-head slicing / shuffling).
        p = jnp.dot(h.astype(MATMUL_DTYPE), wqkv_ref[li],
                    preferred_element_type=jnp.float32)           # (R, 256)
        qkv = p[:, :QKV_HALF] * cos_tbl + p[:, QKV_HALF:] * sin_tbl  # (R, 128)

        # Attention: batched over the batch dim (leading einsum batch axis);
        # short python loops over kv heads / GQA group keep layouts trivial.
        for hk in range(CFG.num_kv_heads):
            k_h = qkv[:, DQ + hk * hd: DQ + (hk + 1) * hd]
            v_h = qkv[:, DQ + DK + hk * hd: DQ + DK + (hk + 1) * hd]
            k_h = k_h.reshape(batch, seq, hd).astype(MATMUL_DTYPE)
            v_h = v_h.reshape(batch, seq, hd).astype(MATMUL_DTYPE)
            for g in range(GQA_GROUP):
                hq = hk * GQA_GROUP + g
                q_h = qkv[:, hq * hd:(hq + 1) * hd]
                q_h = q_h.reshape(batch, seq, hd).astype(MATMUL_DTYPE)
                # scores: scale already folded into the q weight columns
                s = jnp.einsum('bqd,bkd->bqk', q_h, k_h,
                               preferred_element_type=jnp.float32) + bias
                s = s - jnp.max(s, axis=-1, keepdims=True)
                e = jnp.exp(s)
                pr = e * pl.reciprocal(jnp.sum(e, axis=-1, keepdims=True),
                                       approx=True)
                ctx = jnp.einsum('bqk,bkd->bqd', pr.astype(MATMUL_DTYPE), v_h,
                                 preferred_element_type=jnp.float32)
                # Direct slice-write into the VMEM scratch accumulator
                # (replaces the old per-head concatenates).
                attn_scr[:, hq * hd:(hq + 1) * hd] = ctx.reshape(batch * seq, hd)

        # single o_proj matmul over all rows
        x = x + jnp.dot(attn_scr[...].astype(MATMUL_DTYPE), wo_ref[li],
                        preferred_element_type=jnp.float32)

        # ---------------- MLP block ----------------
        h2 = _rmsnorm(x, ln2_ref[li])
        gu = jnp.dot(h2.astype(MATMUL_DTYPE), wgu_ref[li],
                     preferred_element_type=jnp.float32)          # (R, 2I)
        gate = gu[:, :I]
        up = gu[:, I:]
        act = gate * jax.nn.sigmoid(gate) * up                    # SiLU(g)*u, f32
        x = x + jnp.dot(act.astype(MATMUL_DTYPE), wd_ref[li],
                        preferred_element_type=jnp.float32)

    # ---------------- final norm + tied lm_head ----------------
    hf = _rmsnorm(x, fln_ref[...])
    o_ref[...] = jnp.dot(hf.astype(MATMUL_DTYPE), embt_ref[...],
                         preferred_element_type=jnp.float32)


# ----------------------------- parameters ------------------------------------
def _swap_head_halves_cols(w, n_heads, hd):
    """Column-permute (in,out) weight so each head's output halves are swapped
    (the negation of rotate-half is folded into the sin table, not here)."""
    half = hd // 2
    parts = []
    for h in range(n_heads):
        blk = w[:, h * hd:(h + 1) * hd]
        parts.append(jnp.concatenate([blk[:, half:], blk[:, :half]], axis=1))
    return jnp.concatenate(parts, axis=1)


def init_params(key):
    D, I, V = CFG.embed_dim, CFG.intermediate_dim, CFG.vocab_size
    Hq, Hkv, hd = CFG.num_q_heads, CFG.num_kv_heads, HEAD_DIM

    def nrm(k, shape):
        return jax.random.normal(k, shape, dtype=jnp.float32) * 0.02

    keys = jax.random.split(key, 1 + CFG.num_layers)
    emb = nrm(keys[0], (V, D))
    emb = emb.at[CFG.eos_token_id].set(0.0)          # padding_idx row zeroed

    q_scale = 1.0 / math.sqrt(hd)                    # attention scale folded into wq

    ln1, ln2, wqkv, wo, wgu, wd = [], [], [], [], [], []
    for li in range(CFG.num_layers):
        lk = jax.random.split(keys[1 + li], 7)
        # stored as (in, out) == W^T; q/k/v columns are head-major
        wq_t = nrm(lk[0], (D, Hq * hd)) * q_scale
        wk_t = nrm(lk[1], (D, Hkv * hd))
        wv_t = nrm(lk[2], (D, Hkv * hd))
        fused = jnp.concatenate(
            [wq_t, wk_t, wv_t,
             _swap_head_halves_cols(wq_t, Hq, hd),
             _swap_head_halves_cols(wk_t, Hkv, hd),
             jnp.zeros((D, Hkv * hd), jnp.float32)], axis=1)      # (D, 256)
        wqkv.append(fused)
        wo.append(nrm(lk[3], (D, D)))
        wgu.append(jnp.concatenate([nrm(lk[4], (D, I)),
                                    nrm(lk[5], (D, I))], axis=1))  # (D, 2I)
        wd.append(nrm(lk[6], (I, D)))
        ln1.append(jnp.ones((1, D), jnp.float32))
        ln2.append(jnp.ones((1, D), jnp.float32))

    return dict(
        emb=emb,                                        # (V, D) f32 for the gather
        emb_t=jnp.asarray(emb.T, MATMUL_DTYPE),         # derived once from emb (tied lm_head)
        ln1=jnp.stack(ln1), ln2=jnp.stack(ln2),         # (L, 1, D) f32
        wqkv=jnp.stack(wqkv).astype(MATMUL_DTYPE),      # (L, D, 256)
        wo=jnp.stack(wo).astype(MATMUL_DTYPE),          # (L, D, D)
        wgu=jnp.stack(wgu).astype(MATMUL_DTYPE),        # (L, D, 2I)
        wd=jnp.stack(wd).astype(MATMUL_DTYPE),          # (L, I, D)
        final_ln=jnp.ones((1, D), jnp.float32),
    )


# ----------------------------- full model forward ----------------------------
@jax.jit
def llama_forward(params, input_ids):
    B, S = input_ids.shape
    D, V = CFG.embed_dim, CFG.vocab_size
    cos_tbl, sin_tbl = build_rope_tables(B, S)      # constant-folds under jit

    # TODO(synk): token-embedding gather stays in plain JAX (data-dependent row
    # gather; a manual in-kernel DMA gather is not worth it at this size).
    x = params["emb"][input_ids].reshape(B * S, D)

    vspec = pl.BlockSpec(memory_space=pltpu.MemorySpace.VMEM)
    kernel = functools.partial(llama_fused_kernel, batch=B, seq=S)
    # TODO(synk): when B*S grows, add a row grid with
    # dimension_semantics=("parallel",) so v7x's second TensorCore is used, and
    # stream per-layer weights / tile lm_head over V for the 64 MiB VMEM budget;
    # at R=16 a single grid step is faster (per-step overhead would dominate).
    logits = pl.pallas_call(
        kernel,
        out_shape=jax.ShapeDtypeStruct((B * S, V), jnp.float32),
        in_specs=[vspec] * 11,
        out_specs=vspec,
        scratch_shapes=[pltpu.VMEM((B * S, D), jnp.float32)],
        compiler_params=pltpu.CompilerParams(vmem_limit_bytes=32 * 1024 * 1024),
    )(x, params["ln1"], params["ln2"], params["wqkv"], params["wo"],
      params["wgu"], params["wd"], params["final_ln"], params["emb_t"],
      cos_tbl, sin_tbl)
    return logits.reshape(B, S, V)


# ----------------------------- main -------------------------------------------
if __name__ == "__main__":
    key = jax.random.PRNGKey(0)
    pkey, ikey = jax.random.split(key)

    params = init_params(pkey)

    B, S = 2, 8
    input_ids = jax.random.randint(ikey, (B, S), 0, CFG.vocab_size, dtype=jnp.int32)

    logits = llama_forward(params, input_ids)
    jax.block_until_ready(logits)

    assert logits.shape == (B, S, CFG.vocab_size)
    assert logits.dtype == jnp.float32
    assert bool(jnp.all(jnp.isfinite(logits)))
    print("KERNEL_OK")
</pallas_src>

<mosaic_0001>
module attributes {stable_mosaic.version = 11 : i64} {
  func.func @llama_fused_kernel(%arg0: memref<16x64xf32, #tpu.memory_space<vmem>>, %arg1: memref<2x1x64xf32, #tpu.memory_space<vmem>>, %arg2: memref<2x1x64xf32, #tpu.memory_space<vmem>>, %arg3: memref<2x64x256xbf16, #tpu.memory_space<vmem>>, %arg4: memref<2x64x64xbf16, #tpu.memory_space<vmem>>, %arg5: memref<2x64x256xbf16, #tpu.memory_space<vmem>>, %arg6: memref<2x128x64xbf16, #tpu.memory_space<vmem>>, %arg7: memref<1x64xf32, #tpu.memory_space<vmem>>, %arg8: memref<64x256xbf16, #tpu.memory_space<vmem>>, %arg9: memref<16x128xf32, #tpu.memory_space<vmem>>, %arg10: memref<16x128xf32, #tpu.memory_space<vmem>>, %arg11: memref<16x256xf32, #tpu.memory_space<vmem>>, %arg12: memref<16x64xf32, #tpu.memory_space<vmem>>) attributes {dimension_semantics = [], scalar_prefetch = 0 : i64, scratch_operands = 1 : i64, tpu.core_type = #tpu.core_type<tc>} {
    %c0 = arith.constant 0 : index
    %c0_0 = arith.constant 0 : index
    %0 = vector.load %arg0[%c0, %c0_0] : memref<16x64xf32, #tpu.memory_space<vmem>>, vector<16x64xf32>
    %c0_1 = arith.constant 0 : index
    %c0_2 = arith.constant 0 : index
    %1 = vector.load %arg9[%c0_1, %c0_2] : memref<16x128xf32, #tpu.memory_space<vmem>>, vector<16x128xf32>
    %c0_3 = arith.constant 0 : index
    %c0_4 = arith.constant 0 : index
    %2 = vector.load %arg10[%c0_3, %c0_4] : memref<16x128xf32, #tpu.memory_space<vmem>>, vector<16x128xf32>
    %3 = tpu.iota {dimensions = array<i32: 1>} : vector<2x8x8xi32>
    %4 = tpu.iota {dimensions = array<i32: 2>} : vector<2x8x8xi32>
    %5 = arith.cmpi sgt, %4, %3 : vector<2x8x8xi32>
    %cst = arith.constant -1.000000e+09 : f32
    %cst_5 = arith.constant 0.000000e+00 : f32
    %6 = vector.broadcast %cst : f32 to vector<2x8x8xf32>
    %7 = vector.broadcast %cst_5 : f32 to vector<2x8x8xf32>
    %8 = arith.select %5, %6, %7 : vector<2x8x8xi1>, vector<2x8x8xf32>
    %c0_6 = arith.constant 0 : index
    %c0_7 = arith.constant 0 : index
    %c0_8 = arith.constant 0 : index
    %9 = vector.load %arg1[%c0_6, %c0_7, %c0_8] : memref<2x1x64xf32, #tpu.memory_space<vmem>>, vector<1x1x64xf32>
    %10 = vector.shape_cast %9 : vector<1x1x64xf32> to vector<1x64xf32>
    %11 = arith.mulf %0, %0 : vector<16x64xf32>
    %cst_9 = arith.constant dense<0.000000e+00> : vector<16xf32>
    %12 = vector.multi_reduction <add>, %11, %cst_9 [1] : vector<16x64xf32> to vector<16xf32>
    %13 = vector.shape_cast %12 : vector<16xf32> to vector<16x1xf32>
    %cst_10 = arith.constant 6.400000e+01 : f32
    %14 = vector.broadcast %cst_10 : f32 to vector<16x1xf32>
    %15 = arith.divf %13, %14 : vector<16x1xf32>
    %cst_11 = arith.constant 9.99999974E-6 : f32
    %16 = vector.broadcast %cst_11 : f32 to vector<16x1xf32>
    %17 = arith.addf %15, %16 : vector<16x1xf32>
    %18 = math.rsqrt %17 : vector<16x1xf32>
    %19 = vector.broadcast %18 : vector<16x1xf32> to vector<16x64xf32>
    %20 = arith.mulf %0, %19 : vector<16x64xf32>
    %21 = vector.broadcast %10 : vector<1x64xf32> to vector<16x64xf32>
    %22 = arith.mulf %20, %21 : vector<16x64xf32>
    %23 = arith.truncf %22 : vector<16x64xf32> to vector<16x64xbf16>
    %c0_12 = arith.constant 0 : index
    %c0_13 = arith.constant 0 : index
    %c0_14 = arith.constant 0 : index
    %24 = vector.load %arg3[%c0_12, %c0_13, %c0_14] : memref<2x64x256xbf16, #tpu.memory_space<vmem>>, vector<1x64x256xbf16>
    %25 = vector.shape_cast %24 : vector<1x64x256xbf16> to vector<64x256xbf16>
    %cst_15 = arith.constant dense<0.000000e+00> : vector<16x256xf32>
    %26 = tpu.matmul %23, %25, %cst_15 {dimension_numbers = #tpu.dot_dimension_numbers<[1], [0], [0], [1], [0, 0, 1, 1], [], []>} : vector<16x64xbf16>, vector<64x256xbf16>, vector<16x256xf32> -> vector<16x256xf32>
    %27 = vector.extract_strided_slice %26 {offsets = [0, 0], sizes = [16, 128], strides = [1, 1]} : vector<16x256xf32> to vector<16x128xf32>
    %28 = arith.mulf %27, %1 : vector<16x128xf32>
    %29 = vector.extract_strided_slice %26 {offsets = [0, 128], sizes = [16, 128], strides = [1, 1]} : vector<16x256xf32> to vector<16x128xf32>
    %30 = arith.mulf %29, %2 : vector<16x128xf32>
    %31 = arith.addf %28, %30 : vector<16x128xf32>
    %32 = vector.extract_strided_slice %31 {offsets = [0, 64], sizes = [16, 16], strides = [1, 1]} : vector<16x128xf32> to vector<16x16xf32>
    %33 = vector.extract_strided_slice %31 {offsets = [0, 96], sizes = [16, 16], strides = [1, 1]} : vector<16x128xf32> to vector<16x16xf32>
    %34 = vector.shape_cast %32 : vector<16x16xf32> to vector<2x8x16xf32>
    %35 = arith.truncf %34 : vector<2x8x16xf32> to vector<2x8x16xbf16>
    %36 = vector.shape_cast %33 : vector<16x16xf32> to vector<2x8x16xf32>
    %37 = arith.truncf %36 : vector<2x8x16xf32> to vector<2x8x16xbf16>
    %38 = vector.extract_strided_slice %31 {offsets = [0, 0], sizes = [16, 16], strides = [1, 1]} : vector<16x128xf32> to vector<16x16xf32>
    %39 = vector.shape_cast %38 : vector<16x16xf32> to vector<2x8x16xf32>
    %40 = arith.truncf %39 : vector<2x8x16xf32> to vector<2x8x16xbf16>
    "tpu.trace_start"() <{level = 10 : i32, message = "bqd,bkd->bqk"}> : () -> ()
    %cst_16 = arith.constant dense<0.000000e+00> : vector<2x8x8xf32>
    %41 = tpu.matmul %40, %35, %cst_16 {dimension_numbers = #tpu.dot_dimension_numbers<[2], [2], [1], [1], [0, 0, 0, 1, 1, 1], [0], [0]>} : vector<2x8x16xbf16>, vector<2x8x16xbf16>, vector<2x8x8xf32> -> vector<2x8x8xf32>
    "tpu.trace_stop"() : () -> ()
    %42 = arith.addf %41, %8 : vector<2x8x8xf32>
    %cst_17 = arith.constant dense<0xFF800000> : vector<2x8xf32>
    %43 = vector.multi_reduction <maximumf>, %42, %cst_17 [2] : vector<2x8x8xf32> to vector<2x8xf32>
    %44 = vector.shape_cast %43 : vector<2x8xf32> to vector<2x8x1xf32>
    %45 = vector.broadcast %44 : vector<2x8x1xf32> to vector<2x8x8xf32>
    %46 = arith.subf %42, %45 : vector<2x8x8xf32>
    %47 = math.exp %46 : vector<2x8x8xf32>
    %cst_18 = arith.constant dense<0.000000e+00> : vector<2x8xf32>
    %48 = vector.multi_reduction <add>, %47, %cst_18 [2] : vector<2x8x8xf32> to vector<2x8xf32>
    %49 = vector.shape_cast %48 : vector<2x8xf32> to vector<2x8x1xf32>
    %50 = tpu.reciprocal %49 {approx = true} : vector<2x8x1xf32> -> vector<2x8x1xf32>
    %51 = vector.broadcast %50 : vector<2x8x1xf32> to vector<2x8x8xf32>
    %52 = arith.mulf %47, %51 : vector<2x8x8xf32>
    %53 = arith.truncf %52 : vector<2x8x8xf32> to vector<2x8x8xbf16>
    "tpu.trace_start"() <{level = 10 : i32, message = "bqk,bkd->bqd"}> : () -> ()
    %cst_19 = arith.constant dense<0.000000e+00> : vector<2x8x16xf32>
    %54 = tpu.matmul %53, %37, %cst_19 {dimension_numbers = #tpu.dot_dimension_numbers<[2], [1], [1], [2], [0, 0, 0, 1, 1, 2], [0], [0]>} : vector<2x8x8xbf16>, vector<2x8x16xbf16>, vector<2x8x16xf32> -> vector<2x8x16xf32>
    "tpu.trace_stop"() : () -> ()
    %55 = vector.shape_cast %54 : vector<2x8x16xf32> to vector<16x16xf32>
    %c0_20 = arith.constant 0 : index
    %c0_21 = arith.constant 0 : index
    %56 = vector.load %arg12[%c0_20, %c0_21] : memref<16x64xf32, #tpu.memory_space<vmem>>, vector<16x16xf32>
    tpu.vector_store %arg12[%c0_20, %c0_21], %55 {strides = array<i32>} : memref<16x64xf32, #tpu.memory_space<vmem>>, vector<16x16xf32>,
    %57 = vector.extract_strided_slice %31 {offsets = [0, 16], sizes = [16, 16], strides = [1, 1]} : vector<16x128xf32> to vector<16x16xf32>
    %58 = vector.shape_cast %57 : vector<16x16xf32> to vector<2x8x16xf32>
    %59 = arith.truncf %58 : vector<2x8x16xf32> to vector<2x8x16xbf16>
    "tpu.trace_start"() <{level = 10 : i32, message = "bqd,bkd->bqk"}> : () -> ()
    %cst_22 = arith.constant dense<0.000000e+00> : vector<2x8x8xf32>
    %60 = tpu.matmul %59, %35, %cst_22 {dimension_numbers = #tpu.dot_dimension_numbers<[2], [2], [1], [1], [0, 0, 0, 1, 1, 1], [0], [0]>} : vector<2x8x16xbf16>, vector<2x8x16xbf16>, vector<2x8x8xf32> -> vector<2x8x8xf32>
    "tpu.trace_stop"() : () -> ()
    %61 = arith.addf %60, %8 : vector<2x8x8xf32>
    %cst_23 = arith.constant dense<0xFF800000> : vector<2x8xf32>
    %62 = vector.multi_reduction <maximumf>, %61, %cst_23 [2] : vector<2x8x8xf32> to vector<2x8xf32>
    %63 = vector.shape_cast %62 : vector<2x8xf32> to vector<2x8x1xf32>
    %64 = vector.broadcast %63 : vector<2x8x1xf32> to vector<2x8x8xf32>
    %65 = arith.subf %61, %64 : vector<2x8x8xf32>
    %66 = math.exp %65 : vector<2x8x8xf32>
    %cst_24 = arith.constant dense<0.000000e+00> : vector<2x8xf32>
    %67 = vector.multi_reduction <add>, %66, %cst_24 [2] : vector<2x8x8xf32> to vector<2x8xf32>
    %68 = vector.shape_cast %67 : vector<2x8xf32> to vector<2x8x1xf32>
    %69 = tpu.reciprocal %68 {approx = true} : vector<2x8x1xf32> -> vector<2x8x1xf32>
    %70 = vector.broadcast %69 : vector<2x8x1xf32> to vector<2x8x8xf32>
    %71 = arith.mulf %66, %70 : vector<2x8x8xf32>
    %72 = arith.truncf %71 : vector<2x8x8xf32> to vector<2x8x8xbf16>
    "tpu.trace_start"() <{level = 10 : i32, message = "bqk,bkd->bqd"}> : () -> ()
    %cst_25 = arith.constant dense<0.000000e+00> : vector<2x8x16xf32>
    %73 = tpu.matmul %72, %37, %cst_25 {dimension_numbers = #tpu.dot_dimension_numbers<[2], [1], [1], [2], [0, 0, 0, 1, 1, 2], [0], [0]>} : vector<2x8x8xbf16>, vector<2x8x16xbf16>, vector<2x8x16xf32> -> vector<2x8x16xf32>
    "tpu.trace_stop"() : () -> ()
    %74 = vector.shape_cast %73 : vector<2x8x16xf32> to vector<16x16xf32>
    %c0_26 = arith.constant 0 : index
    %c16 = arith.constant 16 : index
    %75 = vector.load %arg12[%c0_26, %c16] : memref<16x64xf32, #tpu.memory_space<vmem>>, vector<16x16xf32>
    tpu.vector_store %arg12[%c0_26, %c16], %74 {strides = array<i32>} : memref<16x64xf32, #tpu.memory_space<vmem>>, vector<16x16xf32>,
    %76 = vector.extract_strided_slice %31 {offsets = [0, 80], sizes = [16, 16], strides = [1, 1]} : vector<16x128xf32> to vector<16x16xf32>
    %77 = vector.extract_strided_slice %31 {offsets = [0, 112], sizes = [16, 16], strides = [1, 1]} : vector<16x128xf32> to vector<16x16xf32>
    %78 = vector.shape_cast %76 : vector<16x16xf32> to vector<2x8x16xf32>
    %79 = arith.truncf %78 : vector<2x8x16xf32> to vector<2x8x16xbf16>
    %80 = vector.shape_cast %77 : vector<16x16xf32> to vector<2x8x16xf32>
    %81 = arith.truncf %80 : vector<2x8x16xf32> to vector<2x8x16xbf16>
    %82 = vector.extract_strided_slice %31 {offsets = [0, 32], sizes = [16, 16], strides = [1, 1]} : vector<16x128xf32> to vector<16x16xf32>
    %83 = vector.shape_cast %82 : vector<16x16xf32> to vector<2x8x16xf32>
    %84 = arith.truncf %83 : vector<2x8x16xf32> to vector<2x8x16xbf16>
    "tpu.trace_start"() <{level = 10 : i32, message = "bqd,bkd->bqk"}> : () -> ()
    %cst_27 = arith.constant dense<0.000000e+00> : vector<2x8x8xf32>
    %85 = tpu.matmul %84, %79, %cst_27 {dimension_numbers = #tpu.dot_dimension_numbers<[2], [2], [1], [1], [0, 0, 0, 1, 1, 1], [0], [0]>} : vector<2x8x16xbf16>, vector<2x8x16xbf16>, vector<2x8x8xf32> -> vector<2x8x8xf32>
    "tpu.trace_stop"() : () -> ()
    %86 = arith.addf %85, %8 : vector<2x8x8xf32>
    %cst_28 = arith.constant dense<0xFF800000> : vector<2x8xf32>
    %87 = vector.multi_reduction <maximumf>, %86, %cst_28 [2] : vector<2x8x8xf32> to vector<2x8xf32>
    %88 = vector.shape_cast %87 : vector<2x8xf32> to vector<2x8x1xf32>
    %89 = vector.broadcast %88 : vector<2x8x1xf32> to vector<2x8x8xf32>
    %90 = arith.subf %86, %89 : vector<2x8x8xf32>
    %91 = math.exp %90 : vector<2x8x8xf32>
    %cst_29 = arith.constant dense<0.000000e+00> : vector<2x8xf32>
    %92 = vector.multi_reduction <add>, %91, %cst_29 [2] : vector<2x8x8xf32> to vector<2x8xf32>
    %93 = vector.shape_cast %92 : vector<2x8xf32> to vector<2x8x1xf32>
    %94 = tpu.reciprocal %93 {approx = true} : vector<2x8x1xf32> -> vector<2x8x1xf32>
    %95 = vector.broadcast %94 : vector<2x8x1xf32> to vector<2x8x8xf32>
    %96 = arith.mulf %91, %95 : vector<2x8x8xf32>
    %97 = arith.truncf %96 : vector<2x8x8xf32> to vector<2x8x8xbf16>
    "tpu.trace_start"() <{level = 10 : i32, message = "bqk,bkd->bqd"}> : () -> ()
    %cst_30 = arith.constant dense<0.000000e+00> : vector<2x8x16xf32>
    %98 = tpu.matmul %97, %81, %cst_30 {dimension_numbers = #tpu.dot_dimension_numbers<[2], [1], [1], [2], [0, 0, 0, 1, 1, 2], [0], [0]>} : vector<2x8x8xbf16>, vector<2x8x16xbf16>, vector<2x8x16xf32> -> vector<2x8x16xf32>
    "tpu.trace_stop"() : () -> ()
    %99 = vector.shape_cast %98 : vector<2x8x16xf32> to vector<16x16xf32>
    %c0_31 = arith.constant 0 : index
    %c32 = arith.constant 32 : index
    %100 = vector.load %arg12[%c0_31, %c32] : memref<16x64xf32, #tpu.memory_space<vmem>>, vector<16x16xf32>
    tpu.vector_store %arg12[%c0_31, %c32], %99 {strides = array<i32>} : memref<16x64xf32, #tpu.memory_space<vmem>>, vector<16x16xf32>,
    %101 = vector.extract_strided_slice %31 {offsets = [0, 48], sizes = [16, 16], strides = [1, 1]} : vector<16x128xf32> to vector<16x16xf32>
    %102 = vector.shape_cast %101 : vector<16x16xf32> to vector<2x8x16xf32>
    %103 = arith.truncf %102 : vector<2x8x16xf32> to vector<2x8x16xbf16>
    "tpu.trace_start"() <{level = 10 : i32, message = "bqd,bkd->bqk"}> : () -> ()
    %cst_32 = arith.constant dense<0.000000e+00> : vector<2x8x8xf32>
    %104 = tpu.matmul %103, %79, %cst_32 {dimension_numbers = #tpu.dot_dimension_numbers<[2], [2], [1], [1], [0, 0, 0, 1, 1, 1], [0], [0]>} : vector<2x8x16xbf16>, vector<2x8x16xbf16>, vector<2x8x8xf32> -> vector<2x8x8xf32>
    "tpu.trace_stop"() : () -> ()
    %105 = arith.addf %104, %8 : vector<2x8x8xf32>
    %cst_33 = arith.constant dense<0xFF800000> : vector<2x8xf32>
    %106 = vector.multi_reduction <maximumf>, %105, %cst_33 [2] : vector<2x8x8xf32> to vector<2x8xf32>
    %107 = vector.shape_cast %106 : vector<2x8xf32> to vector<2x8x1xf32>
    %108 = vector.broadcast %107 : vector<2x8x1xf32> to vector<2x8x8xf32>
    %109 = arith.subf %105, %108 : vector<2x8x8xf32>
    %110 = math.exp %109 : vector<2x8x8xf32>
    %cst_34 = arith.constant dense<0.000000e+00> : vector<2x8xf32>
    %111 = vector.multi_reduction <add>, %110, %cst_34 [2] : vector<2x8x8xf32> to vector<2x8xf32>
    %112 = vector.shape_cast %111 : vector<2x8xf32> to vector<2x8x1xf32>
    %113 = tpu.reciprocal %112 {approx = true} : vector<2x8x1xf32> -> vector<2x8x1xf32>
    %114 = vector.broadcast %113 : vector<2x8x1xf32> to vector<2x8x8xf32>
    %115 = arith.mulf %110, %114 : vector<2x8x8xf32>
    %116 = arith.truncf %115 : vector<2x8x8xf32> to vector<2x8x8xbf16>
    "tpu.trace_start"() <{level = 10 : i32, message = "bqk,bkd->bqd"}> : () -> ()
    %cst_35 = arith.constant dense<0.000000e+00> : vector<2x8x16xf32>
    %117 = tpu.matmul %116, %81, %cst_35 {dimension_numbers = #tpu.dot_dimension_numbers<[2], [1], [1], [2], [0, 0, 0, 1, 1, 2], [0], [0]>} : vector<2x8x8xbf16>, vector<2x8x16xbf16>, vector<2x8x16xf32> -> vector<2x8x16xf32>
    "tpu.trace_stop"() : () -> ()
    %118 = vector.shape_cast %117 : vector<2x8x16xf32> to vector<16x16xf32>
    %c0_36 = arith.constant 0 : index
    %c48 = arith.constant 48 : index
    %119 = vector.load %arg12[%c0_36, %c48] : memref<16x64xf32, #tpu.memory_space<vmem>>, vector<16x16xf32>
    tpu.vector_store %arg12[%c0_36, %c48], %118 {strides = array<i32>} : memref<16x64xf32, #tpu.memory_space<vmem>>, vector<16x16xf32>,
    %c0_37 = arith.constant 0 : index
    %c0_38 = arith.constant 0 : index
    %120 = vector.load %arg12[%c0_37, %c0_38] : memref<16x64xf32, #tpu.memory_space<vmem>>, vector<16x64xf32>
    %121 = arith.truncf %120 : vector<16x64xf32> to vector<16x64xbf16>
    %c0_39 = arith.constant 0 : index
    %c0_40 = arith.constant 0 : index
    %c0_41 = arith.constant 0 : index
    %122 = vector.load %arg4[%c0_39, %c0_40, %c0_41] : memref<2x64x64xbf16, #tpu.memory_space<vmem>>, vector<1x64x64xbf16>
    %123 = vector.shape_cast %122 : vector<1x64x64xbf16> to vector<64x64xbf16>
    %cst_42 = arith.constant dense<0.000000e+00> : vector<16x64xf32>
    %124 = tpu.matmul %121, %123, %cst_42 {dimension_numbers = #tpu.dot_dimension_numbers<[1], [0], [0], [1], [0, 0, 1, 1], [], []>} : vector<16x64xbf16>, vector<64x64xbf16>, vector<16x64xf32> -> vector<16x64xf32>
    %125 = arith.addf %0, %124 : vector<16x64xf32>
    %c0_43 = arith.constant 0 : index
    %c0_44 = arith.constant 0 : index
    %c0_45 = arith.constant 0 : index
    %126 = vector.load %arg2[%c0_43, %c0_44, %c0_45] : memref<2x1x64xf32, #tpu.memory_space<vmem>>, vector<1x1x64xf32>
    %127 = vector.shape_cast %126 : vector<1x1x64xf32> to vector<1x64xf32>
    %128 = arith.mulf %125, %125 : vector<16x64xf32>
    %cst_46 = arith.constant dense<0.000000e+00> : vector<16xf32>
    %129 = vector.multi_reduction <add>, %128, %cst_46 [1] : vector<16x64xf32> to vector<16xf32>
    %130 = vector.shape_cast %129 : vector<16xf32> to vector<16x1xf32>
    %cst_47 = arith.constant 6.400000e+01 : f32
    %131 = vector.broadcast %cst_47 : f32 to vector<16x1xf32>
    %132 = arith.divf %130, %131 : vector<16x1xf32>
    %cst_48 = arith.constant 9.99999974E-6 : f32
    %133 = vector.broadcast %cst_48 : f32 to vector<16x1xf32>
    %134 = arith.addf %132, %133 : vector<16x1xf32>
    %135 = math.rsqrt %134 : vector<16x1xf32>
    %136 = vector.broadcast %135 : vector<16x1xf32> to vector<16x64xf32>
    %137 = arith.mulf %125, %136 : vector<16x64xf32>
    %138 = vector.broadcast %127 : vector<1x64xf32> to vector<16x64xf32>
    %139 = arith.mulf %137, %138 : vector<16x64xf32>
    %140 = arith.truncf %139 : vector<16x64xf32> to vector<16x64xbf16>
    %c0_49 = arith.constant 0 : index
    %c0_50 = arith.constant 0 : index
    %c0_51 = arith.constant 0 : index
    %141 = vector.load %arg5[%c0_49, %c0_50, %c0_51] : memref<2x64x256xbf16, #tpu.memory_space<vmem>>, vector<1x64x256xbf16>
    %142 = vector.shape_cast %141 : vector<1x64x256xbf16> to vector<64x256xbf16>
    %cst_52 = arith.constant dense<0.000000e+00> : vector<16x256xf32>
    %143 = tpu.matmul %140, %142, %cst_52 {dimension_numbers = #tpu.dot_dimension_numbers<[1], [0], [0], [1], [0, 0, 1, 1], [], []>} : vector<16x64xbf16>, vector<64x256xbf16>, vector<16x256xf32> -> vector<16x256xf32>
    %144 = vector.extract_strided_slice %143 {offsets = [0, 0], sizes = [16, 128], strides = [1, 1]} : vector<16x256xf32> to vector<16x128xf32>
    %145 = vector.extract_strided_slice %143 {offsets = [0, 128], sizes = [16, 128], strides = [1, 1]} : vector<16x256xf32> to vector<16x128xf32>
    %146 = arith.negf %144 : vector<16x128xf32>
    %147 = math.exp %146 : vector<16x128xf32>
    %cst_53 = arith.constant 1.000000e+00 : f32
    %148 = vector.broadcast %cst_53 : f32 to vector<16x128xf32>
    %149 = arith.addf %148, %147 : vector<16x128xf32>
    %150 = arith.divf %148, %149 : vector<16x128xf32>
    %151 = arith.mulf %144, %150 : vector<16x128xf32>
    %152 = arith.mulf %151, %145 : vector<16x128xf32>
    %153 = arith.truncf %152 : vector<16x128xf32> to vector<16x128xbf16>
    %c0_54 = arith.constant 0 : index
    %c0_55 = arith.constant 0 : index
    %c0_56 = arith.constant 0 : index
    %154 = vector.load %arg6[%c0_54, %c0_55, %c0_56] : memref<2x128x64xbf16, #tpu.memory_space<vmem>>, vector<1x128x64xbf16>
    %155 = vector.shape_cast %154 : vector<1x128x64xbf16> to vector<128x64xbf16>
    %cst_57 = arith.constant dense<0.000000e+00> : vector<16x64xf32>
    %156 = tpu.matmul %153, %155, %cst_57 {dimension_numbers = #tpu.dot_dimension_numbers<[1], [0], [0], [1], [0, 0, 1, 1], [], []>} : vector<16x128xbf16>, vector<128x64xbf16>, vector<16x64xf32> -> vector<16x64xf32>
    %157 = arith.addf %125, %156 : vector<16x64xf32>
    %c1 = arith.constant 1 : index
    %c0_58 = arith.constant 0 : index
    %c0_59 = arith.constant 0 : index
    %158 = vector.load %arg1[%c1, %c0_58, %c0_59] : memref<2x1x64xf32, #tpu.memory_space<vmem>>, vector<1x1x64xf32>
    %159 = vector.shape_cast %158 : vector<1x1x64xf32> to vector<1x64xf32>
    %160 = arith.mulf %157, %157 : vector<16x64xf32>
    %cst_60 = arith.constant dense<0.000000e+00> : vector<16xf32>
    %161 = vector.multi_reduction <add>, %160, %cst_60 [1] : vector<16x64xf32> to vector<16xf32>
    %162 = vector.shape_cast %161 : vector<16xf32> to vector<16x1xf32>
    %cst_61 = arith.constant 6.400000e+01 : f32
    %163 = vector.broadcast %cst_61 : f32 to vector<16x1xf32>
    %164 = arith.divf %162, %163 : vector<16x1xf32>
    %cst_62 = arith.constant 9.99999974E-6 : f32
    %165 = vector.broadcast %cst_62 : f32 to vector<16x1xf32>
    %166 = arith.addf %164, %165 : vector<16x1xf32>
    %167 = math.rsqrt %166 : vector<16x1xf32>
    %168 = vector.broadcast %167 : vector<16x1xf32> to vector<16x64xf32>
    %169 = arith.mulf %157, %168 : vector<16x64xf32>
    %170 = vector.broadcast %159 : vector<1x64xf32> to vector<16x64xf32>
    %171 = arith.mulf %169, %170 : vector<16x64xf32>
    %172 = arith.truncf %171 : vector<16x64xf32> to vector<16x64xbf16>
    %c1_63 = arith.constant 1 : index
    %c0_64 = arith.constant 0 : index
    %c0_65 = arith.constant 0 : index
    %173 = vector.load %arg3[%c1_63, %c0_64, %c0_65] : memref<2x64x256xbf16, #tpu.memory_space<vmem>>, vector<1x64x256xbf16>
    %174 = vector.shape_cast %173 : vector<1x64x256xbf16> to vector<64x256xbf16>
    %cst_66 = arith.constant dense<0.000000e+00> : vector<16x256xf32>
    %175 = tpu.matmul %172, %174, %cst_66 {dimension_numbers = #tpu.dot_dimension_numbers<[1], [0], [0], [1], [0, 0, 1, 1], [], []>} : vector<16x64xbf16>, vector<64x256xbf16>, vector<16x256xf32> -> vector<16x256xf32>
    %176 = vector.extract_strided_slice %175 {offsets = [0, 0], sizes = [16, 128], strides = [1, 1]} : vector<16x256xf32> to vector<16x128xf32>
    %177 = arith.mulf %176, %1 : vector<16x128xf32>
    %178 = vector.extract_strided_slice %175 {offsets = [0, 128], sizes = [16, 128], strides = [1, 1]} : vector<16x256xf32> to vector<16x128xf32>
    %179 = arith.mulf %178, %2 : vector<16x128xf32>
    %180 = arith.addf %177, %179 : vector<16x128xf32>
    %181 = vector.extract_strided_slice %180 {offsets = [0, 64], sizes = [16, 16], strides = [1, 1]} : vector<16x128xf32> to vector<16x16xf32>
    %182 = vector.extract_strided_slice %180 {offsets = [0, 96], sizes = [16, 16], strides = [1, 1]} : vector<16x128xf32> to vector<16x16xf32>
    %183 = vector.shape_cast %181 : vector<16x16xf32> to vector<2x8x16xf32>
    %184 = arith.truncf %183 : vector<2x8x16xf32> to vector<2x8x16xbf16>
    %185 = vector.shape_cast %182 : vector<16x16xf32> to vector<2x8x16xf32>
    %186 = arith.truncf %185 : vector<2x8x16xf32> to vector<2x8x16xbf16>
    %187 = vector.extract_strided_slice %180 {offsets = [0, 0], sizes = [16, 16], strides = [1, 1]} : vector<16x128xf32> to vector<16x16xf32>
    %188 = vector.shape_cast %187 : vector<16x16xf32> to vector<2x8x16xf32>
    %189 = arith.truncf %188 : vector<2x8x16xf32> to vector<2x8x16xbf16>
    "tpu.trace_start"() <{level = 10 : i32, message = "bqd,bkd->bqk"}> : () -> ()
    %cst_67 = arith.constant dense<0.000000e+00> : vector<2x8x8xf32>
    %190 = tpu.matmul %189, %184, %cst_67 {dimension_numbers = #tpu.dot_dimension_numbers<[2], [2], [1], [1], [0, 0, 0, 1, 1, 1], [0], [0]>} : vector<2x8x16xbf16>, vector<2x8x16xbf16>, vector<2x8x8xf32> -> vector<2x8x8xf32>
    "tpu.trace_stop"() : () -> ()
    %191 = arith.addf %190, %8 : vector<2x8x8xf32>
    %cst_68 = arith.constant dense<0xFF800000> : vector<2x8xf32>
    %192 = vector.multi_reduction <maximumf>, %191, %cst_68 [2] : vector<2x8x8xf32> to vector<2x8xf32>
    %193 = vector.shape_cast %192 : vector<2x8xf32> to vector<2x8x1xf32>
    %194 = vector.broadcast %193 : vector<2x8x1xf32> to vector<2x8x8xf32>
    %195 = arith.subf %191, %194 : vector<2x8x8xf32>
    %196 = math.exp %195 : vector<2x8x8xf32>
    %cst_69 = arith.constant dense<0.000000e+00> : vector<2x8xf32>
    %197 = vector.multi_reduction <add>, %196, %cst_69 [2] : vector<2x8x8xf32> to vector<2x8xf32>
    %198 = vector.shape_cast %197 : vector<2x8xf32> to vector<2x8x1xf32>
    %199 = tpu.reciprocal %198 {approx = true} : vector<2x8x1xf32> -> vector<2x8x1xf32>
    %200 = vector.broadcast %199 : vector<2x8x1xf32> to vector<2x8x8xf32>
    %201 = arith.mulf %196, %200 : vector<2x8x8xf32>
    %202 = arith.truncf %201 : vector<2x8x8xf32> to vector<2x8x8xbf16>
    "tpu.trace_start"() <{level = 10 : i32, message = "bqk,bkd->bqd"}> : () -> ()
    %cst_70 = arith.constant dense<0.000000e+00> : vector<2x8x16xf32>
    %203 = tpu.matmul %202, %186, %cst_70 {dimension_numbers = #tpu.dot_dimension_numbers<[2], [1], [1], [2], [0, 0, 0, 1, 1, 2], [0], [0]>} : vector<2x8x8xbf16>, vector<2x8x16xbf16>, vector<2x8x16xf32> -> vector<2x8x16xf32>
    "tpu.trace_stop"() : () -> ()
    %204 = vector.shape_cast %203 : vector<2x8x16xf32> to vector<16x16xf32>
    %c0_71 = arith.constant 0 : index
    %c0_72 = arith.constant 0 : index
    %205 = vector.load %arg12[%c0_71, %c0_72] : memref<16x64xf32, #tpu.memory_space<vmem>>, vector<16x16xf32>
    tpu.vector_store %arg12[%c0_71, %c0_72], %204 {strides = array<i32>} : memref<16x64xf32, #tpu.memory_space<vmem>>, vector<16x16xf32>,
    %206 = vector.extract_strided_slice %180 {offsets = [0, 16], sizes = [16, 16], strides = [1, 1]} : vector<16x128xf32> to vector<16x16xf32>
    %207 = vector.shape_cast %206 : vector<16x16xf32> to vector<2x8x16xf32>
    %208 = arith.truncf %207 : vector<2x8x16xf32> to vector<2x8x16xbf16>
    "tpu.trace_start"() <{level = 10 : i32, message = "bqd,bkd->bqk"}> : () -> ()
    %cst_73 = arith.constant dense<0.000000e+00> : vector<2x8x8xf32>
    %209 = tpu.matmul %208, %184, %cst_73 {dimension_numbers = #tpu.dot_dimension_numbers<[2], [2], [1], [1], [0, 0, 0, 1, 1, 1], [0], [0]>} : vector<2x8x16xbf16>, vector<2x8x16xbf16>, vector<2x8x8xf32> -> vector<2x8x8xf32>
    "tpu.trace_stop"() : () -> ()
    %210 = arith.addf %209, %8 : vector<2x8x8xf32>
    %cst_74 = arith.constant dense<0xFF800000> : vector<2x8xf32>
    %211 = vector.multi_reduction <maximumf>, %210, %cst_74 [2] : vector<2x8x8xf32> to vector<2x8xf32>
    %212 = vector.shape_cast %211 : vector<2x8xf32> to vector<2x8x1xf32>
    %213 = vector.broadcast %212 : vector<2x8x1xf32> to vector<2x8x8xf32>
    %214 = arith.subf %210, %213 : vector<2x8x8xf32>
    %215 = math.exp %214 : vector<2x8x8xf32>
    %cst_75 = arith.constant dense<0.000000e+00> : vector<2x8xf32>
    %216 = vector.multi_reduction <add>, %215, %cst_75 [2] : vector<2x8x8xf32> to vector<2x8xf32>
    %217 = vector.shape_cast %216 : vector<2x8xf32> to vector<2x8x1xf32>
    %218 = tpu.reciprocal %217 {approx = true} : vector<2x8x1xf32> -> vector<2x8x1xf32>
    %219 = vector.broadcast %218 : vector<2x8x1xf32> to vector<2x8x8xf32>
    %220 = arith.mulf %215, %219 : vector<2x8x8xf32>
    %221 = arith.truncf %220 : vector<2x8x8xf32> to vector<2x8x8xbf16>
    "tpu.trace_start"() <{level = 10 : i32, message = "bqk,bkd->bqd"}> : () -> ()
    %cst_76 = arith.constant dense<0.000000e+00> : vector<2x8x16xf32>
    %222 = tpu.matmul %221, %186, %cst_76 {dimension_numbers = #tpu.dot_dimension_numbers<[2], [1], [1], [2], [0, 0, 0, 1, 1, 2], [0], [0]>} : vector<2x8x8xbf16>, vector<2x8x16xbf16>, vector<2x8x16xf32> -> vector<2x8x16xf32>
    "tpu.trace_stop"() : () -> ()
    %223 = vector.shape_cast %222 : vector<2x8x16xf32> to vector<16x16xf32>
    %c0_77 = arith.constant 0 : index
    %c16_78 = arith.constant 16 : index
    %224 = vector.load %arg12[%c0_77, %c16_78] : memref<16x64xf32, #tpu.memory_space<vmem>>, vector<16x16xf32>
    tpu.vector_store %arg12[%c0_77, %c16_78], %223 {strides = array<i32>} : memref<16x64xf32, #tpu.memory_space<vmem>>, vector<16x16xf32>,
    %225 = vector.extract_strided_slice %180 {offsets = [0, 80], sizes = [16, 16], strides = [1, 1]} : vector<16x128xf32> to vector<16x16xf32>
    %226 = vector.extract_strided_slice %180 {offsets = [0, 112], sizes = [16, 16], strides = [1, 1]} : vector<16x128xf32> to vector<16x16xf32>
    %227 = vector.shape_cast %225 : vector<16x16xf32> to vector<2x8x16xf32>
    %228 = arith.truncf %227 : vector<2x8x16xf32> to vector<2x8x16xbf16>
    %229 = vector.shape_cast %226 : vector<16x16xf32> to vector<2x8x16xf32>
    %230 = arith.truncf %229 : vector<2x8x16xf32> to vector<2x8x16xbf16>
    %231 = vector.extract_strided_slice %180 {offsets = [0, 32], sizes = [16, 16], strides = [1, 1]} : vector<16x128xf32> to vector<16x16xf32>
    %232 = vector.shape_cast %231 : vector<16x16xf32> to vector<2x8x16xf32>
    %233 = arith.truncf %232 : vector<2x8x16xf32> to vector<2x8x16xbf16>
    "tpu.trace_start"() <{level = 10 : i32, message = "bqd,bkd->bqk"}> : () -> ()
    %cst_79 = arith.constant dense<0.000000e+00> : vector<2x8x8xf32>
    %234 = tpu.matmul %233, %228, %cst_79 {dimension_numbers = #tpu.dot_dimension_numbers<[2], [2], [1], [1], [0, 0, 0, 1, 1, 1], [0], [0]>} : vector<2x8x16xbf16>, vector<2x8x16xbf16>, vector<2x8x8xf32> -> vector<2x8x8xf32>
    "tpu.trace_stop"() : () -> ()
    %235 = arith.addf %234, %8 : vector<2x8x8xf32>
    %cst_80 = arith.constant dense<0xFF800000> : vector<2x8xf32>
    %236 = vector.multi_reduction <maximumf>, %235, %cst_80 [2] : vector<2x8x8xf32> to vector<2x8xf32>
    %237 = vector.shape_cast %236 : vector<2x8xf32> to vector<2x8x1xf32>
    %238 = vector.broadcast %237 : vector<2x8x1xf32> to vector<2x8x8xf32>
    %239 = arith.subf %235, %238 : vector<2x8x8xf32>
    %240 = math.exp %239 : vector<2x8x8xf32>
    %cst_81 = arith.constant dense<0.000000e+00> : vector<2x8xf32>
    %241 = vector.multi_reduction <add>, %240, %cst_81 [2] : vector<2x8x8xf32> to vector<2x8xf32>
    %242 = vector.shape_cast %241 : vector<2x8xf32> to vector<2x8x1xf32>
    %243 = tpu.reciprocal %242 {approx = true} : vector<2x8x1xf32> -> vector<2x8x1xf32>
    %244 = vector.broadcast %243 : vector<2x8x1xf32> to vector<2x8x8xf32>
    %245 = arith.mulf %240, %244 : vector<2x8x8xf32>
    %246 = arith.truncf %245 : vector<2x8x8xf32> to vector<2x8x8xbf16>
    "tpu.trace_start"() <{level = 10 : i32, message = "bqk,bkd->bqd"}> : () -> ()
    %cst_82 = arith.constant dense<0.000000e+00> : vector<2x8x16xf32>
    %247 = tpu.matmul %246, %230, %cst_82 {dimension_numbers = #tpu.dot_dimension_numbers<[2], [1], [1], [2], [0, 0, 0, 1, 1, 2], [0], [0]>} : vector<2x8x8xbf16>, vector<2x8x16xbf16>, vector<2x8x16xf32> -> vector<2x8x16xf32>
    "tpu.trace_stop"() : () -> ()
    %248 = vector.shape_cast %247 : vector<2x8x16xf32> to vector<16x16xf32>
    %c0_83 = arith.constant 0 : index
    %c32_84 = arith.constant 32 : index
    %249 = vector.load %arg12[%c0_83, %c32_84] : memref<16x64xf32, #tpu.memory_space<vmem>>, vector<16x16xf32>
    tpu.vector_store %arg12[%c0_83, %c32_84], %248 {strides = array<i32>} : memref<16x64xf32, #tpu.memory_space<vmem>>, vector<16x16xf32>,
    %250 = vector.extract_strided_slice %180 {offsets = [0, 48], sizes = [16, 16], strides = [1, 1]} : vector<16x128xf32> to vector<16x16xf32>
    %251 = vector.shape_cast %250 : vector<16x16xf32> to vector<2x8x16xf32>
    %252 = arith.truncf %251 : vector<2x8x16xf32> to vector<2x8x16xbf16>
    "tpu.trace_start"() <{level = 10 : i32, message = "bqd,bkd->bqk"}> : () -> ()
    %cst_85 = arith.constant dense<0.000000e+00> : vector<2x8x8xf32>
    %253 = tpu.matmul %252, %228, %cst_85 {dimension_numbers = #tpu.dot_dimension_numbers<[2], [2], [1], [1], [0, 0, 0, 1, 1, 1], [0], [0]>} : vector<2x8x16xbf16>, vector<2x8x16xbf16>, vector<2x8x8xf32> -> vector<2x8x8xf32>
    "tpu.trace_stop"() : () -> ()
    %254 = arith.addf %253, %8 : vector<2x8x8xf32>
    %cst_86 = arith.constant dense<0xFF800000> : vector<2x8xf32>
    %255 = vector.multi_reduction <maximumf>, %254, %cst_86 [2] : vector<2x8x8xf32> to vector<2x8xf32>
    %256 = vector.shape_cast %255 : vector<2x8xf32> to vector<2x8x1xf32>
    %257 = vector.broadcast %256 : vector<2x8x1xf32> to vector<2x8x8xf32>
    %258 = arith.subf %254, %257 : vector<2x8x8xf32>
    %259 = math.exp %258 : vector<2x8x8xf32>
    %cst_87 = arith.constant dense<0.000000e+00> : vector<2x8xf32>
    %260 = vector.multi_reduction <add>, %259, %cst_87 [2] : vector<2x8x8xf32> to vector<2x8xf32>
    %261 = vector.shape_cast %260 : vector<2x8xf32> to vector<2x8x1xf32>
    %262 = tpu.reciprocal %261 {approx = true} : vector<2x8x1xf32> -> vector<2x8x1xf32>
    %263 = vector.broadcast %262 : vector<2x8x1xf32> to vector<2x8x8xf32>
    %264 = arith.mulf %259, %263 : vector<2x8x8xf32>
    %265 = arith.truncf %264 : vector<2x8x8xf32> to vector<2x8x8xbf16>
    "tpu.trace_start"() <{level = 10 : i32, message = "bqk,bkd->bqd"}> : () -> ()
    %cst_88 = arith.constant dense<0.000000e+00> : vector<2x8x16xf32>
    %266 = tpu.matmul %265, %230, %cst_88 {dimension_numbers = #tpu.dot_dimension_numbers<[2], [1], [1], [2], [0, 0, 0, 1, 1, 2], [0], [0]>} : vector<2x8x8xbf16>, vector<2x8x16xbf16>, vector<2x8x16xf32> -> vector<2x8x16xf32>
    "tpu.trace_stop"() : () -> ()
    %267 = vector.shape_cast %266 : vector<2x8x16xf32> to vector<16x16xf32>
    %c0_89 = arith.constant 0 : index
    %c48_90 = arith.constant 48 : index
    %268 = vector.load %arg12[%c0_89, %c48_90] : memref<16x64xf32, #tpu.memory_space<vmem>>, vector<16x16xf32>
    tpu.vector_store %arg12[%c0_89, %c48_90], %267 {strides = array<i32>} : memref<16x64xf32, #tpu.memory_space<vmem>>, vector<16x16xf32>,
    %c0_91 = arith.constant 0 : index
    %c0_92 = arith.constant 0 : index
    %269 = vector.load %arg12[%c0_91, %c0_92] : memref<16x64xf32, #tpu.memory_space<vmem>>, vector<16x64xf32>
    %270 = arith.truncf %269 : vector<16x64xf32> to vector<16x64xbf16>
    %c1_93 = arith.constant 1 : index
    %c0_94 = arith.constant 0 : index
    %c0_95 = arith.constant 0 : index
    %271 = vector.load %arg4[%c1_93, %c0_94, %c0_95] : memref<2x64x64xbf16, #tpu.memory_space<vmem>>, vector<1x64x64xbf16>
    %272 = vector.shape_cast %271 : vector<1x64x64xbf16> to vector<64x64xbf16>
    %cst_96 = arith.constant dense<0.000000e+00> : vector<16x64xf32>
    %273 = tpu.matmul %270, %272, %cst_96 {dimension_numbers = #tpu.dot_dimension_numbers<[1], [0], [0], [1], [0, 0, 1, 1], [], []>} : vector<16x64xbf16>, vector<64x64xbf16>, vector<16x64xf32> -> vector<16x64xf32>
    %274 = arith.addf %157, %273 : vector<16x64xf32>
    %c1_97 = arith.constant 1 : index
    %c0_98 = arith.constant 0 : index
    %c0_99 = arith.constant 0 : index
    %275 = vector.load %arg2[%c1_97, %c0_98, %c0_99] : memref<2x1x64xf32, #tpu.memory_space<vmem>>, vector<1x1x64xf32>
    %276 = vector.shape_cast %275 : vector<1x1x64xf32> to vector<1x64xf32>
    %277 = arith.mulf %274, %274 : vector<16x64xf32>
    %cst_100 = arith.constant dense<0.000000e+00> : vector<16xf32>
    %278 = vector.multi_reduction <add>, %277, %cst_100 [1] : vector<16x64xf32> to vector<16xf32>
    %279 = vector.shape_cast %278 : vector<16xf32> to vector<16x1xf32>
    %cst_101 = arith.constant 6.400000e+01 : f32
    %280 = vector.broadcast %cst_101 : f32 to vector<16x1xf32>
    %281 = arith.divf %279, %280 : vector<16x1xf32>
    %cst_102 = arith.constant 9.99999974E-6 : f32
    %282 = vector.broadcast %cst_102 : f32 to vector<16x1xf32>
    %283 = arith.addf %281, %282 : vector<16x1xf32>
    %284 = math.rsqrt %283 : vector<16x1xf32>
    %285 = vector.broadcast %284 : vector<16x1xf32> to vector<16x64xf32>
    %286 = arith.mulf %274, %285 : vector<16x64xf32>
    %287 = vector.broadcast %276 : vector<1x64xf32> to vector<16x64xf32>
    %288 = arith.mulf %286, %287 : vector<16x64xf32>
    %289 = arith.truncf %288 : vector<16x64xf32> to vector<16x64xbf16>
    %c1_103 = arith.constant 1 : index
    %c0_104 = arith.constant 0 : index
    %c0_105 = arith.constant 0 : index
    %290 = vector.load %arg5[%c1_103, %c0_104, %c0_105] : memref<2x64x256xbf16, #tpu.memory_space<vmem>>, vector<1x64x256xbf16>
    %291 = vector.shape_cast %290 : vector<1x64x256xbf16> to vector<64x256xbf16>
    %cst_106 = arith.constant dense<0.000000e+00> : vector<16x256xf32>
    %292 = tpu.matmul %289, %291, %cst_106 {dimension_numbers = #tpu.dot_dimension_numbers<[1], [0], [0], [1], [0, 0, 1, 1], [], []>} : vector<16x64xbf16>, vector<64x256xbf16>, vector<16x256xf32> -> vector<16x256xf32>
    %293 = vector.extract_strided_slice %292 {offsets = [0, 0], sizes = [16, 128], strides = [1, 1]} : vector<16x256xf32> to vector<16x128xf32>
    %294 = vector.extract_strided_slice %292 {offsets = [0, 128], sizes = [16, 128], strides = [1, 1]} : vector<16x256xf32> to vector<16x128xf32>
    %295 = arith.negf %293 : vector<16x128xf32>
    %296 = math.exp %295 : vector<16x128xf32>
    %cst_107 = arith.constant 1.000000e+00 : f32
    %297 = vector.broadcast %cst_107 : f32 to vector<16x128xf32>
    %298 = arith.addf %297, %296 : vector<16x128xf32>
    %299 = arith.divf %297, %298 : vector<16x128xf32>
    %300 = arith.mulf %293, %299 : vector<16x128xf32>
    %301 = arith.mulf %300, %294 : vector<16x128xf32>
    %302 = arith.truncf %301 : vector<16x128xf32> to vector<16x128xbf16>
    %c1_108 = arith.constant 1 : index
    %c0_109 = arith.constant 0 : index
    %c0_110 = arith.constant 0 : index
    %303 = vector.load %arg6[%c1_108, %c0_109, %c0_110] : memref<2x128x64xbf16, #tpu.memory_space<vmem>>, vector<1x128x64xbf16>
    %304 = vector.shape_cast %303 : vector<1x128x64xbf16> to vector<128x64xbf16>
    %cst_111 = arith.constant dense<0.000000e+00> : vector<16x64xf32>
    %305 = tpu.matmul %302, %304, %cst_111 {dimension_numbers = #tpu.dot_dimension_numbers<[1], [0], [0], [1], [0, 0, 1, 1], [], []>} : vector<16x128xbf16>, vector<128x64xbf16>, vector<16x64xf32> -> vector<16x64xf32>
    %306 = arith.addf %274, %305 : vector<16x64xf32>
    %c0_112 = arith.constant 0 : index
    %c0_113 = arith.constant 0 : index
    %307 = vector.load %arg7[%c0_112, %c0_113] : memref<1x64xf32, #tpu.memory_space<vmem>>, vector<1x64xf32>
    %308 = arith.mulf %306, %306 : vector<16x64xf32>
    %cst_114 = arith.constant dense<0.000000e+00> : vector<16xf32>
    %309 = vector.multi_reduction <add>, %308, %cst_114 [1] : vector<16x64xf32> to vector<16xf32>
    %310 = vector.shape_cast %309 : vector<16xf32> to vector<16x1xf32>
    %cst_115 = arith.constant 6.400000e+01 : f32
    %311 = vector.broadcast %cst_115 : f32 to vector<16x1xf32>
    %312 = arith.divf %310, %311 : vector<16x1xf32>
    %cst_116 = arith.constant 9.99999974E-6 : f32
    %313 = vector.broadcast %cst_116 : f32 to vector<16x1xf32>
    %314 = arith.addf %312, %313 : vector<16x1xf32>
    %315 = math.rsqrt %314 : vector<16x1xf32>
    %316 = vector.broadcast %315 : vector<16x1xf32> to vector<16x64xf32>
    %317 = arith.mulf %306, %316 : vector<16x64xf32>
    %318 = vector.broadcast %307 : vector<1x64xf32> to vector<16x64xf32>
    %319 = arith.mulf %317, %318 : vector<16x64xf32>
    %320 = arith.truncf %319 : vector<16x64xf32> to vector<16x64xbf16>
    %c0_117 = arith.constant 0 : index
    %c0_118 = arith.constant 0 : index
    %321 = vector.load %arg8[%c0_117, %c0_118] : memref<64x256xbf16, #tpu.memory_space<vmem>>, vector<64x256xbf16>
    %cst_119 = arith.constant dense<0.000000e+00> : vector<16x256xf32>
    %322 = tpu.matmul %320, %321, %cst_119 {dimension_numbers = #tpu.dot_dimension_numbers<[1], [0], [0], [1], [0, 0, 1, 1], [], []>} : vector<16x64xbf16>, vector<64x256xbf16>, vector<16x256xf32> -> vector<16x256xf32>
    %c0_120 = arith.constant 0 : index
    %c0_121 = arith.constant 0 : index
    %323 = vector.load %arg11[%c0_120, %c0_121] : memref<16x256xf32, #tpu.memory_space<vmem>>, vector<16x256xf32>
    tpu.vector_store %arg11[%c0_120, %c0_121], %322 {strides = array<i32>} : memref<16x256xf32, #tpu.memory_space<vmem>>, vector<16x256xf32>,
    return
  }
}

</mosaic_0001>

<llo_original>
// kernel: tile.39
$region0: #{tile.39}
  %s0 = inlined_call_operand.vmem [shape: f32[8,2,16], index: 0, kind: input, shape index: {}]
  %s1 = inlined_call_operand.vmem [shape: f32[8,32], index: 1, kind: output, shape index: {}]
  $region1: #{tile.39} parent=0
    #allocation0 [shape = 'u8[32768]{0}', space=vmem, size = 0x8000, scoped, tag = 'scoped mem for input reshape']
    %s3 = ssub.s32 4, 1
    %s4 = scalar_lea.vmem %s0, 14
    %v5 = vld [vmem:[%s4] sm:%s3]
    %s6 = scalar_lea.vmem [#allocation0], 56
    %7 = vst [vmem:[%s6] sm:%s3] %v5
    %s8 = scalar_lea.vmem %s0, 12
    %v9 = vld [vmem:[%s8] sm:%s3]
    %s10 = scalar_lea.vmem [#allocation0], 48
    %11 = vst [vmem:[%s10] sm:%s3] %v9
    %s12 = scalar_lea.vmem %s0, 10
    %v13 = vld [vmem:[%s12] sm:%s3]
    %s14 = scalar_lea.vmem [#allocation0], 40
    %15 = vst [vmem:[%s14] sm:%s3] %v13
    %s16 = scalar_lea.vmem %s0, 8
    %v17 = vld [vmem:[%s16] sm:%s3]
    %s18 = scalar_lea.vmem [#allocation0], 32
    %19 = vst [vmem:[%s18] sm:%s3] %v17
    %s20 = scalar_lea.vmem %s0, 6
    %v21 = vld [vmem:[%s20] sm:%s3]
    %s22 = scalar_lea.vmem [#allocation0], 24
    %23 = vst [vmem:[%s22] sm:%s3] %v21
    %s24 = scalar_lea.vmem %s0, 4
    %v25 = vld [vmem:[%s24] sm:%s3]
    %s26 = scalar_lea.vmem [#allocation0], 16
    %27 = vst [vmem:[%s26] sm:%s3] %v25
    %s28 = scalar_lea.vmem %s0, 2
    %v29 = vld [vmem:[%s28] sm:%s3]
    %s30 = scalar_lea.vmem [#allocation0], 8
    %31 = vst [vmem:[%s30] sm:%s3] %v29
    %v32 = vld [vmem:[%s0] sm:%s3]
    %33 = vst [vmem:[#allocation0] sm:%s3] %v32
    %v34 = vld [vmem:[#allocation0] ss:$8 sm:$0xf]
    %v35 = vld [vmem:[#allocation0] ss:$8 sm:$0xf0]
    %vm36 = vcmask 1047556
    %v37 = vsel %vm36, %v35, %v34
    %vm38 = vcmask 130048
    %39 = vst.msk [vmem:[%s1] sm:$0xff] %vm38, %v37
    %s40 = scalar_lea.vmem [#allocation0], 1
    %v41 = vld [vmem:[%s40] ss:$8 sm:$0xf]
    %s42 = scalar_lea.vmem [#allocation0], 1
    %v43 = vld [vmem:[%s42] ss:$8 sm:$0xf0]
    %vm44 = vcmask 1047556
    %v45 = vsel %vm44, %v43, %v41
    %46 = vrot.lane.b32.xlu0 %v45, 16
    %v47 = vpop.permute.xlu0 %46
    %vm48 = vcmask 261248
    %49 = vst.msk [vmem:[%s1] sm:$0xff] %vm48, %v47

// kernel: tile.34
$region0: #{tile.34}
  %s0 = inlined_call_operand.vmem [shape: f32[8,4,16], index: 0, kind: input, shape index: {}]
  %s1 = inlined_call_operand.vmem [shape: f32[8,64], index: 1, kind: output, shape index: {}]
  $region1: #{tile.34} parent=0
    #allocation0 [shape = 'u8[32768]{0}', space=vmem, size = 0x8000, scoped, tag = 'scoped mem for input reshape']
    %s3 = ssub.s32 16, 1
    %s4 = scalar_lea.vmem %s0, 28
    %v5 = vld [vmem:[%s4] sm:%s3]
    %s6 = scalar_lea.vmem [#allocation0], 56
    %7 = vst [vmem:[%s6] sm:%s3] %v5
    %s8 = scalar_lea.vmem %s0, 24
    %v9 = vld [vmem:[%s8] sm:%s3]
    %s10 = scalar_lea.vmem [#allocation0], 48
    %11 = vst [vmem:[%s10] sm:%s3] %v9
    %s12 = scalar_lea.vmem %s0, 20
    %v13 = vld [vmem:[%s12] sm:%s3]
    %s14 = scalar_lea.vmem [#allocation0], 40
    %15 = vst [vmem:[%s14] sm:%s3] %v13
    %s16 = scalar_lea.vmem %s0, 16
    %v17 = vld [vmem:[%s16] sm:%s3]
    %s18 = scalar_lea.vmem [#allocation0], 32
    %19 = vst [vmem:[%s18] sm:%s3] %v17
    %s20 = scalar_lea.vmem %s0, 12
    %v21 = vld [vmem:[%s20] sm:%s3]
    %s22 = scalar_lea.vmem [#allocation0], 24
    %23 = vst [vmem:[%s22] sm:%s3] %v21
    %s24 = scalar_lea.vmem %s0, 8
    %v25 = vld [vmem:[%s24] sm:%s3]
    %s26 = scalar_lea.vmem [#allocation0], 16
    %27 = vst [vmem:[%s26] sm:%s3] %v25
    %s28 = scalar_lea.vmem %s0, 4
    %v29 = vld [vmem:[%s28] sm:%s3]
    %s30 = scalar_lea.vmem [#allocation0], 8
    %31 = vst [vmem:[%s30] sm:%s3] %v29
    %v32 = vld [vmem:[%s0] sm:%s3]
    %33 = vst [vmem:[#allocation0] sm:%s3] %v32
    %v34 = vld [vmem:[#allocation0] ss:$8 sm:$0xf]
    %v35 = vld [vmem:[#allocation0] ss:$8 sm:$0xf0]
    %vm36 = vcmask 1047556
    %v37 = vsel %vm36, %v35, %v34
    %vm38 = vcmask 130048
    %39 = vst.msk [vmem:[%s1] sm:$0xff] %vm38, %v37
    %s40 = scalar_lea.vmem [#allocation0], 3
    %v41 = vld [vmem:[%s40] ss:$8 sm:$0xf]
    %s42 = scalar_lea.vmem [#allocation0], 3
    %v43 = vld [vmem:[%s42] ss:$8 sm:$0xf0]
    %vm44 = vcmask 1047556
    %v45 = vsel %vm44, %v43, %v41
    %46 = vrot.lane.b32.xlu0 %v45, 48
    %v47 = vpop.permute.xlu0 %46
    %vm48 = vcmask 523648
    %49 = vst.msk [vmem:[%s1] sm:$0xff] %vm48, %v47
    %s50 = scalar_lea.vmem [#allocation0], 2
    %v51 = vld [vmem:[%s50] ss:$8 sm:$0xf]
    %s52 = scalar_lea.vmem [#allocation0], 2
    %v53 = vld [vmem:[%s52] ss:$8 sm:$0xf0]
    %vm54 = vcmask 1047556
    %v55 = vsel %vm54, %v53, %v51
    %56 = vrot.lane.b32.xlu0 %v55, 32
    %v57 = vpop.permute.xlu0 %56
    %vm58 = vcmask 392448
    %59 = vst.msk [vmem:[%s1] sm:$0xff] %vm58, %v57
    %s60 = scalar_lea.vmem [#allocation0], 1
    %v61 = vld [vmem:[%s60] ss:$8 sm:$0xf]
    %s62 = scalar_lea.vmem [#allocation0], 1
    %v63 = vld [vmem:[%s62] ss:$8 sm:$0xf0]
    %vm64 = vcmask 1047556
    %v65 = vsel %vm64, %v63, %v61
    %66 = vrot.lane.b32.xlu0 %v65, 16
    %v67 = vpop.permute.xlu0 %66
    %vm68 = vcmask 261248
    %69 = vst.msk [vmem:[%s1] sm:$0xff] %vm68, %v67

// kernel: llama_forward.1
$region0: #{llama_forward.1}
  #allocation0 [shape = 'u32[]', space=smem, size = 0x4, offset = 0x4, fixed_abs, tag = 'smem constant byte address 0x4 - core index']
  #allocation1 [shape = 'u32[72,128]{1,0:T(1,128)}', space=vmem, size = 0x9000, scoped, tag = 'internal scratch']
  #allocation2 [shape = 'f32[16,64]{1,0:T(8,128)}', space=vmem, size = 0x2000, scoped, tag = 'scratch operand']
  %s0 = inlined_call_operand.vmem [shape: f32[16,64], index: 0, kind: input, shape index: {}]
  %s1 = inlined_call_operand.vmem [shape: f32[2,1,64], index: 1, kind: input, shape index: {}]
  %s2 = inlined_call_operand.vmem [shape: f32[2,1,64], index: 2, kind: input, shape index: {}]
  %s3 = inlined_call_operand.vmem [shape: bf16[2,64,256], index: 3, kind: input, shape index: {}]
  %s4 = inlined_call_operand.vmem [shape: bf16[2,64,64], index: 4, kind: input, shape index: {}]
  %s5 = inlined_call_operand.vmem [shape: bf16[2,64,256], index: 5, kind: input, shape index: {}]
  %s6 = inlined_call_operand.vmem [shape: bf16[2,128,64], index: 6, kind: input, shape index: {}]
  %s7 = inlined_call_operand.vmem [shape: f32[1,64], index: 7, kind: input, shape index: {}]
  %s8 = inlined_call_operand.vmem [shape: bf16[64,256], index: 8, kind: input, shape index: {}]
  %s9 = inlined_call_operand.vmem [shape: f32[16,128], index: 9, kind: input, shape index: {}]
  %s10 = inlined_call_operand.vmem [shape: f32[16,128], index: 10, kind: input, shape index: {}]
  %s11 = inlined_call_operand.hbm [shape: f32[16,256], index: 11, kind: output, shape index: {}]
  %s12 = sld [smem:[#allocation0]]
  $region54: #{llama_forward.1} parent=0
    _
  %s14 = ssub.s32 1, %s12
  %s15 = scalar_select 0, %s14, %s12
  $region1: #{llama_forward.1} parent=0
    #allocation3 [shape = 'u8[16384]{0}', space=vmem, size = 0x4000, scoped, tag = 'output window, operand 0, single buffered']
    #allocation4 [shape = 's32[1]{0}', space=sflag, size = 0x4, scoped, tag = 'scoped memory for llama_forward.1']
    %16 = vsyncpa [#allocation4], 0
    // Predicated region
    $region2: #{llama_forward.1} parent=1 // pred_check
      _
    $region3: #{llama_forward.1} parent=1 // pred_check_branch
      %18 = sbr.rel (0) target = $region5
    $region4: #{llama_forward.1} parent=1 // pred_region
      _
    $region5: #{llama_forward.1} parent=1 // pred_fallthru
      _
    // Predicated region
    $region6: #{llama_forward.1} parent=1 // pred_check
      _
    $region7: #{llama_forward.1} parent=1 // pred_check_branch
      %20 = sbr.rel (0) target = $region9
    $region8: #{llama_forward.1} parent=1 // pred_region
      _
    $region9: #{llama_forward.1} parent=1 // pred_fallthru
      _
    // Predicated region
    $region10: #{llama_forward.1} parent=1 // pred_check
      _
    $region11: #{llama_forward.1} parent=1 // pred_check_branch
      %22 = sbr.rel (0) target = $region13
    $region12: #{llama_forward.1} parent=1 // pred_region
      _
    $region13: #{llama_forward.1} parent=1 // pred_fallthru
      _
    // Predicated region
    $region14: #{llama_forward.1} parent=1 // pred_check
      _
    $region15: #{llama_forward.1} parent=1 // pred_check_branch
      %24 = sbr.rel (0) target = $region17
    $region16: #{llama_forward.1} parent=1 // pred_region
      _
    $region17: #{llama_forward.1} parent=1 // pred_fallthru
      _
    // Predicated region
    $region18: #{llama_forward.1} parent=1 // pred_check
      _
    $region19: #{llama_forward.1} parent=1 // pred_check_branch
      %26 = sbr.rel (0) target = $region21
    $region20: #{llama_forward.1} parent=1 // pred_region
      _
    $region21: #{llama_forward.1} parent=1 // pred_fallthru
      _
    // Predicated region
    $region22: #{llama_forward.1} parent=1 // pred_check
      _
    $region23: #{llama_forward.1} parent=1 // pred_check_branch
      %28 = sbr.rel (0) target = $region25
    $region24: #{llama_forward.1} parent=1 // pred_region
      _
    $region25: #{llama_forward.1} parent=1 // pred_fallthru
      _
    // Predicated region
    $region26: #{llama_forward.1} parent=1 // pred_check
      _
    $region27: #{llama_forward.1} parent=1 // pred_check_branch
      %30 = sbr.rel (0) target = $region29
    $region28: #{llama_forward.1} parent=1 // pred_region
      _
    $region29: #{llama_forward.1} parent=1 // pred_fallthru
      _
    // Predicated region
    $region30: #{llama_forward.1} parent=1 // pred_check
      _
    $region31: #{llama_forward.1} parent=1 // pred_check_branch
      %32 = sbr.rel (0) target = $region33
    $region32: #{llama_forward.1} parent=1 // pred_region
      _
    $region33: #{llama_forward.1} parent=1 // pred_fallthru
      _
    // Predicated region
    $region34: #{llama_forward.1} parent=1 // pred_check
      _
    $region35: #{llama_forward.1} parent=1 // pred_check_branch
      %34 = sbr.rel (0) target = $region37
    $region36: #{llama_forward.1} parent=1 // pred_region
      _
    $region37: #{llama_forward.1} parent=1 // pred_fallthru
      _
    // Predicated region
    $region38: #{llama_forward.1} parent=1 // pred_check
      _
    $region39: #{llama_forward.1} parent=1 // pred_check_branch
      %36 = sbr.rel (0) target = $region41
    $region40: #{llama_forward.1} parent=1 // pred_region
      _
    $region41: #{llama_forward.1} parent=1 // pred_fallthru
      _
    // Predicated region
    $region42: #{llama_forward.1} parent=1 // pred_check
      _
    $region43: #{llama_forward.1} parent=1 // pred_check_branch
      %38 = sbr.rel (0) target = $region45
    $region44: #{llama_forward.1} parent=1 // pred_region
      _
    $region45: #{llama_forward.1} parent=1 // pred_fallthru
      _
    %v40 = vld [vmem:[%s0] sm:$0xff]
    %v41 = vld [vmem:[%s0 + $0x8] sm:$0xff]
    %v42 = vld [vmem:[%s9] sm:$0xff]
    %v43 = vld [vmem:[%s9 + $0x8] sm:$0xff]
    %v44 = vld [vmem:[%s10] sm:$0xff]
    %v45 = vld [vmem:[%s10 + $0x8] sm:$0xff]
    %v46 = vlaneseq
    %v47 = vshrl.u32 %v46, 7
    %v48 = vlaneseq
    %v49 = vand.u32 %v48, 127
    %vm50 = vcmp.gt.s32.totalorder %v49, %v47
    %v51 = vsel %vm50, -1e+09, 0.0
    %v52 = vld [vmem:[%s1] sm:$0x1]
    %v53 = vmul.f32 %v40, %v40
    %v54 = vmul.f32 %v41, %v41
    %vm55 = vcmask 523264
    %v56 = vsel %vm55, %v53, 0.0
    %57 = vadd.xlane.f32.xlu0 %v56
    %v58 = vpop.xlane.xlu0 %57
    %v59 = vsel %vm55, %v54, 0.0
    %60 = vadd.xlane.f32.xlu0 %v59
    %v61 = vpop.xlane.xlu0 %60
    %v62 = vrcp.pop 64.0
    %v63 = vmul.f32 64.0, %v62
    %v64 = vsub.f32 1.0, %v63
    %v65 = vmul.f32 %v62, %v64
    %v66 = vadd.f32 %v62, %v65
    %vm67 = vweird.f32 %v62
    %v68 = vsel %vm67, %v62, %v66
    %v69 = vmul.f32 %v58, %v68
    %v70 = vmul.f32 %v61, %v68
    %v71 = vadd.f32 %v69, 1e-05
    %v72 = vadd.f32 %v70, 1e-05
    %v73 = vrsqrt.pop %v71
    %v74 = vmul.f32 %v73, %v71
    %v75 = vmul.f32 %v74, %v73
    %v76 = vmul.f32 0.5, %v75
    %v77 = vsub.f32 1.5, %v76
    %v78 = vmul.f32 %v73, %v77
    %vm79 = vweird.f32 %v71
    %vm80 = vweird.f32 %v73
    %vm81 = vmor %vm79, %vm80
    %v82 = vsel %vm81, %v73, %v78
    %v83 = vrsqrt.pop %v72
    %v84 = vmul.f32 %v83, %v72
    %v85 = vmul.f32 %v84, %v83
    %v86 = vmul.f32 0.5, %v85
    %v87 = vsub.f32 1.5, %v86
    %v88 = vmul.f32 %v83, %v87
    %vm89 = vweird.f32 %v72
    %vm90 = vweird.f32 %v83
    %vm91 = vmor %vm89, %vm90
    %v92 = vsel %vm91, %v83, %v88
    %v93 = vmul.f32 %v40, %v82
    %v94 = vmul.f32 %v41, %v92
    %v96 = vperm.slane %v52, 0
    %v98 = vmul.f32 %v93, %v96
    %v99 = vmul.f32 %v94, %v96
    %v100 = vpack.c.bf16 %v99, %v98
    %v101 = vld [vmem:[%s3] sm:$0xff]
    %v102 = vld [vmem:[%s3 + $0x8] sm:$0xff]
    %v103 = vld [vmem:[%s3 + $0x10] sm:$0xff]
    %v104 = vld [vmem:[%s3 + $0x18] sm:$0xff]
    %v105 = vld [vmem:[%s3 + $0x20] sm:$0xff]
    %v106 = vld [vmem:[%s3 + $0x28] sm:$0xff]
    %v107 = vld [vmem:[%s3 + $0x30] sm:$0xff]
    %v108 = vld [vmem:[%s3 + $0x38] sm:$0xff]
    %v117 = vunpack.c.l.b16 %v101
    %v118 = vunpack.c.h.b16 %v101
    %v119 = vunpack.c.l.b16 %v102
    %v120 = vunpack.c.h.b16 %v102
    %v121 = vunpack.c.l.b16 %v103
    %v122 = vunpack.c.h.b16 %v103
    %v123 = vunpack.c.l.b16 %v104
    %v124 = vunpack.c.h.b16 %v104
    %v125 = vunpack.c.l.b16 %v105
    %v126 = vunpack.c.h.b16 %v105
    %v127 = vunpack.c.l.b16 %v106
    %v128 = vunpack.c.h.b16 %v106
    %v129 = vunpack.c.l.b16 %v107
    %v130 = vunpack.c.h.b16 %v107
    %v131 = vunpack.c.l.b16 %v108
    %v132 = vunpack.c.h.b16 %v108
    %v133 = vpack.c.b16 %v119, %v117
    %v134 = vpack.c.b16 %v120, %v118
    %v135 = vpack.c.b16 %v123, %v121
    %v136 = vpack.c.b16 %v124, %v122
    %v137 = vpack.c.b16 %v127, %v125
    %v138 = vpack.c.b16 %v128, %v126
    %v139 = vpack.c.b16 %v131, %v129
    %v140 = vpack.c.b16 %v132, %v130
    %v150 = vsel %vm55, %v100, 0
    %152 = vmatpush.bf16.msra.mxu0 0
    %153 = vmatpush.bf16.msra.mxu0 0
    %154 = vmatpush.bf16.msra.mxu0 0
    %155 = vmatpush.bf16.msra.mxu0 0
    %156 = vmatpush.bf16.msra.mxu0 %v139
    %157 = vmatpush.bf16.msra.mxu0 %v137
    %158 = vmatpush.bf16.msra.mxu0 %v135
    %159 = vmatpush.bf16.msra.mxu0 %v133
    %160 = vmatmul.bf16.gmra.mxu0 %v150
    %v161 = vpop.f32.mrf.mxu0
    %v162 = vadd.f32 0.0, %v161
    %v163 = vpop.f32.mrf.mxu0
    %v164 = vadd.f32 0.0, %v163
    %165 = vdwg.mxu0
    %166 = vmatpush.bf16.msra.mxu0 0
    %167 = vmatpush.bf16.msra.mxu0 0
    %168 = vmatpush.bf16.msra.mxu0 0
    %169 = vmatpush.bf16.msra.mxu0 0
    %170 = vmatpush.bf16.msra.mxu0 %v140
    %171 = vmatpush.bf16.msra.mxu0 %v138
    %172 = vmatpush.bf16.msra.mxu0 %v136
    %173 = vmatpush.bf16.msra.mxu0 %v134
    %174 = vmatmul.bf16.gmra.mxu0 %v150
    %v175 = vpop.f32.mrf.mxu0
    %v176 = vadd.f32 0.0, %v175
    %v177 = vpop.f32.mrf.mxu0
    %v178 = vadd.f32 0.0, %v177
    %179 = vdwg.mxu0
    %v180 = vmul.f32 %v162, %v42
    %v181 = vmul.f32 %v164, %v43
    %v182 = vmul.f32 %v176, %v44
    %v183 = vmul.f32 %v178, %v45
    %v184 = vadd.f32 %v180, %v182
    %v185 = vadd.f32 %v181, %v183
    %v186 = vpack.c.bf16 %v184, %v184
    %v187 = vpack.c.bf16 %v185, %v185
    %v189 = vunpack.c.l.b16 %v186
    %v190 = vpack.c.b16 %v189, %v189
    %191 = vrot.lane.b32.xlu0 %v190, 64
    %v192 = vpop.permute.xlu0 %191
    %vm193 = vcmask 130048
    %v195 = vsel %vm193, %v186, 0
    %v198 = vsel %vm193, %v192, 0
    %200 = vmatpush.bf16.xpose.msra.mxu0 0
    %201 = vmatpush.bf16.xpose.msra.mxu0 0
    %202 = vmatpush.bf16.xpose.msra.mxu0 0
    %203 = vmatpush.bf16.xpose.msra.mxu0 0
    %204 = vmatpush.bf16.xpose.msra.mxu0 0
    %205 = vmatpush.bf16.xpose.msra.mxu0 0
    %206 = vmatpush.bf16.xpose.msra.mxu0 0
    %207 = vmatpush.bf16.xpose.msra.mxu0 %v198
    %208 = vmatmul.bf16.gmra.mxu0 %v195
    %v209 = vpop.f32.mrf.mxu0
    %v210 = vadd.f32 %v51, %v209
    %v211 = vpop.f32.mrf.mxu0
    %212 = vdwg.mxu0
    %v214 = vunpack.c.l.b16 %v187
    %v215 = vpack.c.b16 %v214, %v214
    %216 = vrot.lane.b32.xlu0 %v215, 64
    %v217 = vpop.permute.xlu0 %216
    %v219 = vsel %vm193, %v187, 0
    %v222 = vsel %vm193, %v217, 0
    %224 = vmatpush.bf16.xpose.msra.mxu0 0
    %225 = vmatpush.bf16.xpose.msra.mxu0 0
    %226 = vmatpush.bf16.xpose.msra.mxu0 0
    %227 = vmatpush.bf16.xpose.msra.mxu0 0
    %228 = vmatpush.bf16.xpose.msra.mxu0 0
    %229 = vmatpush.bf16.xpose.msra.mxu0 0
    %230 = vmatpush.bf16.xpose.msra.mxu0 0
    %231 = vmatpush.bf16.xpose.msra.mxu0 %v222
    %232 = vmatmul.bf16.gmra.mxu0 %v219
    %v233 = vpop.f32.mrf.mxu0
    %v234 = vadd.f32 %v51, %v233
    %v235 = vpop.f32.mrf.mxu0
    %236 = vdwg.mxu0
    %vm237 = vcmask 64512
    %v238 = vsel %vm237, %v210, -inf
    %239 = vmax.xlane.f32.xlu0 %v238
    %v240 = vpop.xlane.xlu0 %239
    %v241 = vsel %vm237, %v234, -inf
    %242 = vmax.xlane.f32.xlu0 %v241
    %v243 = vpop.xlane.xlu0 %242
    %v244 = vsub.f32 %v210, %v240
    %v245 = vsub.f32 %v234, %v243
    %v246 = vmul.f32 %v244, 1.442695
    %v247 = vpow.pop %v246
    %v248 = vmul.f32 %v245, 1.442695
    %v249 = vpow.pop %v248
    %v250 = vsel %vm237, %v247, 0.0
    %251 = vadd.xlane.f32.xlu0 %v250
    %v252 = vpop.xlane.xlu0 %251
    %v253 = vsel %vm237, %v249, 0.0
    %254 = vadd.xlane.f32.xlu0 %v253
    %v255 = vpop.xlane.xlu0 %254
    %v256 = vrcp.pop %v252
    %v257 = vrcp.pop %v255
    %v258 = vmul.f32 %v247, %v256
    %v259 = vmul.f32 %v249, %v257
    %v260 = vpack.c.bf16 %v258, %v258
    %v261 = vpack.c.bf16 %v259, %v259
    %262 = vrot.lane.b32.xlu0 %v190, 32
    %v263 = vpop.permute.xlu0 %262
    %v265 = vsel %vm237, %v260, 0
    %vm267 = vcmask 1043456
    %v269 = vsel %vm267, %v263, 0
    %271 = vmatpush.bf16.msra.mxu0 0
    %272 = vmatpush.bf16.msra.mxu0 0
    %273 = vmatpush.bf16.msra.mxu0 0
    %274 = vmatpush.bf16.msra.mxu0 0
    %275 = vmatpush.bf16.msra.mxu0 0
    %276 = vmatpush.bf16.msra.mxu0 0
    %277 = vmatpush.bf16.msra.mxu0 0
    %278 = vmatpush.bf16.msra.mxu0 %v269
    %279 = vmatmul.bf16.gmra.mxu0 %v265
    %v280 = vpop.f32.mrf.mxu0
    %v281 = vadd.f32 0.0, %v280
    %v282 = vpop.f32.mrf.mxu0
    %283 = vdwg.mxu0
    %284 = vrot.lane.b32.xlu0 %v215, 32
    %v285 = vpop.permute.xlu0 %284
    %v287 = vsel %vm237, %v261, 0
    %v290 = vsel %vm267, %v285, 0
    %292 = vmatpush.bf16.msra.mxu0 0
    %293 = vmatpush.bf16.msra.mxu0 0
    %294 = vmatpush.bf16.msra.mxu0 0
    %295 = vmatpush.bf16.msra.mxu0 0
    %296 = vmatpush.bf16.msra.mxu0 0
    %297 = vmatpush.bf16.msra.mxu0 0
    %298 = vmatpush.bf16.msra.mxu0 0
    %299 = vmatpush.bf16.msra.mxu0 %v290
    %300 = vmatmul.bf16.gmra.mxu0 %v287
    %v301 = vpop.f32.mrf.mxu0
    %v302 = vadd.f32 0.0, %v301
    %v303 = vpop.f32.mrf.mxu0
    %304 = vdwg.mxu0
    %305 = vst.msk [vmem:[#allocation2] sm:$0xff] %vm193, %v281
    %306 = vst.msk [vmem:[#allocation2 + $0x8] sm:$0xff] %vm193, %v302
    %307 = vrot.lane.b32.xlu0 %v190, 112
    %v308 = vpop.permute.xlu0 %307
    %v310 = vsel %vm193, %v308, 0
    %312 = vmatpush.bf16.xpose.msra.mxu0 0
    %313 = vmatpush.bf16.xpose.msra.mxu0 0
    %314 = vmatpush.bf16.xpose.msra.mxu0 0
    %315 = vmatpush.bf16.xpose.msra.mxu0 0
    %316 = vmatpush.bf16.xpose.msra.mxu0 0
    %317 = vmatpush.bf16.xpose.msra.mxu0 0
    %318 = vmatpush.bf16.xpose.msra.mxu0 0
    %319 = vmatpush.bf16.xpose.msra.mxu0 %v198
    %320 = vmatmul.bf16.gmra.mxu0 %v310
    %v321 = vpop.f32.mrf.mxu0
    %v322 = vadd.f32 %v51, %v321
    %v323 = vpop.f32.mrf.mxu0
    %324 = vdwg.mxu0
    %325 = vrot.lane.b32.xlu0 %v215, 112
    %v326 = vpop.permute.xlu0 %325
    %v328 = vsel %vm193, %v326, 0
    %330 = vmatpush.bf16.xpose.msra.mxu0 0
    %331 = vmatpush.bf16.xpose.msra.mxu0 0
    %332 = vmatpush.bf16.xpose.msra.mxu0 0
    %333 = vmatpush.bf16.xpose.msra.mxu0 0
    %334 = vmatpush.bf16.xpose.msra.mxu0 0
    %335 = vmatpush.bf16.xpose.msra.mxu0 0
    %336 = vmatpush.bf16.xpose.msra.mxu0 0
    %337 = vmatpush.bf16.xpose.msra.mxu0 %v222
    %338 = vmatmul.bf16.gmra.mxu0 %v328
    %v339 = vpop.f32.mrf.mxu0
    %v340 = vadd.f32 %v51, %v339
    %v341 = vpop.f32.mrf.mxu0
    %342 = vdwg.mxu0
    %v343 = vsel %vm237, %v322, -inf
    %344 = vmax.xlane.f32.xlu0 %v343
    %v345 = vpop.xlane.xlu0 %344
    %v346 = vsel %vm237, %v340, -inf
    %347 = vmax.xlane.f32.xlu0 %v346
    %v348 = vpop.xlane.xlu0 %347
    %v349 = vsub.f32 %v322, %v345
    %v350 = vsub.f32 %v340, %v348
    %v351 = vmul.f32 %v349, 1.442695
    %v352 = vpow.pop %v351
    %v353 = vmul.f32 %v350, 1.442695
    %v354 = vpow.pop %v353
    %v355 = vsel %vm237, %v352, 0.0
    %356 = vadd.xlane.f32.xlu0 %v355
    %v357 = vpop.xlane.xlu0 %356
    %v358 = vsel %vm237, %v354, 0.0
    %359 = vadd.xlane.f32.xlu0 %v358
    %v360 = vpop.xlane.xlu0 %359
    %v361 = vrcp.pop %v357
    %v362 = vrcp.pop %v360
    %v363 = vmul.f32 %v352, %v361
    %v364 = vmul.f32 %v354, %v362
    %v365 = vpack.c.bf16 %v363, %v363
    %v366 = vpack.c.bf16 %v364, %v364
    %v368 = vsel %vm237, %v365, 0
    %370 = vmatpush.bf16.msra.mxu0 0
    %371 = vmatpush.bf16.msra.mxu0 0
    %372 = vmatpush.bf16.msra.mxu0 0
    %373 = vmatpush.bf16.msra.mxu0 0
    %374 = vmatpush.bf16.msra.mxu0 0
    %375 = vmatpush.bf16.msra.mxu0 0
    %376 = vmatpush.bf16.msra.mxu0 0
    %377 = vmatpush.bf16.msra.mxu0 %v269
    %378 = vmatmul.bf16.gmra.mxu0 %v368
    %v379 = vpop.f32.mrf.mxu0
    %v380 = vadd.f32 0.0, %v379
    %v381 = vpop.f32.mrf.mxu0
    %382 = vdwg.mxu0
    %v384 = vsel %vm237, %v366, 0
    %386 = vmatpush.bf16.msra.mxu0 0
    %387 = vmatpush.bf16.msra.mxu0 0
    %388 = vmatpush.bf16.msra.mxu0 0
    %389 = vmatpush.bf16.msra.mxu0 0
    %390 = vmatpush.bf16.msra.mxu0 0
    %391 = vmatpush.bf16.msra.mxu0 0
    %392 = vmatpush.bf16.msra.mxu0 0
    %393 = vmatpush.bf16.msra.mxu0 %v290
    %394 = vmatmul.bf16.gmra.mxu0 %v384
    %v395 = vpop.f32.mrf.mxu0
    %v396 = vadd.f32 0.0, %v395
    %v397 = vpop.f32.mrf.mxu0
    %398 = vdwg.mxu0
    %401 = vrot.lane.b32.xlu0 %v380, 16
    %v402 = vpop.permute.xlu0 %401
    %403 = vrot.lane.b32.xlu0 %v396, 16
    %v404 = vpop.permute.xlu0 %403
    %vm407 = vcmask 261248
    %408 = vst.msk [vmem:[#allocation2] sm:$0xff] %vm407, %v402
    %409 = vst.msk [vmem:[#allocation2 + $0x8] sm:$0xff] %vm407, %v404
    %410 = vrot.lane.b32.xlu0 %v190, 96
    %v411 = vpop.permute.xlu0 %410
    %412 = vrot.lane.b32.xlu0 %v190, 48
    %v413 = vpop.permute.xlu0 %412
    %v415 = vsel %vm193, %v411, 0
    %v418 = vsel %vm193, %v413, 0
    %420 = vmatpush.bf16.xpose.msra.mxu0 0
    %421 = vmatpush.bf16.xpose.msra.mxu0 0
    %422 = vmatpush.bf16.xpose.msra.mxu0 0
    %423 = vmatpush.bf16.xpose.msra.mxu0 0
    %424 = vmatpush.bf16.xpose.msra.mxu0 0
    %425 = vmatpush.bf16.xpose.msra.mxu0 0
    %426 = vmatpush.bf16.xpose.msra.mxu0 0
    %427 = vmatpush.bf16.xpose.msra.mxu0 %v418
    %428 = vmatmul.bf16.gmra.mxu0 %v415
    %v429 = vpop.f32.mrf.mxu0
    %v430 = vadd.f32 %v51, %v429
    %v431 = vpop.f32.mrf.mxu0
    %432 = vdwg.mxu0
    %433 = vrot.lane.b32.xlu0 %v215, 96
    %v434 = vpop.permute.xlu0 %433
    %435 = vrot.lane.b32.xlu0 %v215, 48
    %v436 = vpop.permute.xlu0 %435
    %v438 = vsel %vm193, %v434, 0
    %v441 = vsel %vm193, %v436, 0
    %443 = vmatpush.bf16.xpose.msra.mxu0 0
    %444 = vmatpush.bf16.xpose.msra.mxu0 0
    %445 = vmatpush.bf16.xpose.msra.mxu0 0
    %446 = vmatpush.bf16.xpose.msra.mxu0 0
    %447 = vmatpush.bf16.xpose.msra.mxu0 0
    %448 = vmatpush.bf16.xpose.msra.mxu0 0
    %449 = vmatpush.bf16.xpose.msra.mxu0 0
    %450 = vmatpush.bf16.xpose.msra.mxu0 %v441
    %451 = vmatmul.bf16.gmra.mxu0 %v438
    %v452 = vpop.f32.mrf.mxu0
    %v453 = vadd.f32 %v51, %v452
    %v454 = vpop.f32.mrf.mxu0
    %455 = vdwg.mxu0
    %v456 = vsel %vm237, %v430, -inf
    %457 = vmax.xlane.f32.xlu0 %v456
    %v458 = vpop.xlane.xlu0 %457
    %v459 = vsel %vm237, %v453, -inf
    %460 = vmax.xlane.f32.xlu0 %v459
    %v461 = vpop.xlane.xlu0 %460
    %v462 = vsub.f32 %v430, %v458
    %v463 = vsub.f32 %v453, %v461
    %v464 = vmul.f32 %v462, 1.442695
    %v465 = vpow.pop %v464
    %v466 = vmul.f32 %v463, 1.442695
    %v467 = vpow.pop %v466
    %v468 = vsel %vm237, %v465, 0.0
    %469 = vadd.xlane.f32.xlu0 %v468
    %v470 = vpop.xlane.xlu0 %469
    %v471 = vsel %vm237, %v467, 0.0
    %472 = vadd.xlane.f32.xlu0 %v471
    %v473 = vpop.xlane.xlu0 %472
    %v474 = vrcp.pop %v470
    %v475 = vrcp.pop %v473
    %v476 = vmul.f32 %v465, %v474
    %v477 = vmul.f32 %v467, %v475
    %v478 = vpack.c.bf16 %v476, %v476
    %v479 = vpack.c.bf16 %v477, %v477
    %480 = vrot.lane.b32.xlu0 %v190, 16
    %v481 = vpop.permute.xlu0 %480
    %v483 = vsel %vm237, %v478, 0
    %v486 = vsel %vm267, %v481, 0
    %488 = vmatpush.bf16.msra.mxu0 0
    %489 = vmatpush.bf16.msra.mxu0 0
    %490 = vmatpush.bf16.msra.mxu0 0
    %491 = vmatpush.bf16.msra.mxu0 0
    %492 = vmatpush.bf16.msra.mxu0 0
    %493 = vmatpush.bf16.msra.mxu0 0
    %494 = vmatpush.bf16.msra.mxu0 0
    %495 = vmatpush.bf16.msra.mxu0 %v486
    %496 = vmatmul.bf16.gmra.mxu0 %v483
    %v497 = vpop.f32.mrf.mxu0
    %v498 = vadd.f32 0.0, %v497
    %v499 = vpop.f32.mrf.mxu0
    %500 = vdwg.mxu0
    %501 = vrot.lane.b32.xlu0 %v215, 16
    %v502 = vpop.permute.xlu0 %501
    %v504 = vsel %vm237, %v479, 0
    %v507 = vsel %vm267, %v502, 0
    %509 = vmatpush.bf16.msra.mxu0 0
    %510 = vmatpush.bf16.msra.mxu0 0
    %511 = vmatpush.bf16.msra.mxu0 0
    %512 = vmatpush.bf16.msra.mxu0 0
    %513 = vmatpush.bf16.msra.mxu0 0
    %514 = vmatpush.bf16.msra.mxu0 0
    %515 = vmatpush.bf16.msra.mxu0 0
    %516 = vmatpush.bf16.msra.mxu0 %v507
    %517 = vmatmul.bf16.gmra.mxu0 %v504
    %v518 = vpop.f32.mrf.mxu0
    %v519 = vadd.f32 0.0, %v518
    %v520 = vpop.f32.mrf.mxu0
    %521 = vdwg.mxu0
    %524 = vrot.lane.b32.xlu0 %v498, 32
    %v525 = vpop.permute.xlu0 %524
    %526 = vrot.lane.b32.xlu0 %v519, 32
    %v527 = vpop.permute.xlu0 %526
    %vm530 = vcmask 392448
    %531 = vst.msk [vmem:[#allocation2] sm:$0xff] %vm530, %v525
    %532 = vst.msk [vmem:[#allocation2 + $0x8] sm:$0xff] %vm530, %v527
    %533 = vrot.lane.b32.xlu0 %v190, 80
    %v534 = vpop.permute.xlu0 %533
    %v536 = vsel %vm193, %v534, 0
    %538 = vmatpush.bf16.xpose.msra.mxu0 0
    %539 = vmatpush.bf16.xpose.msra.mxu0 0
    %540 = vmatpush.bf16.xpose.msra.mxu0 0
    %541 = vmatpush.bf16.xpose.msra.mxu0 0
    %542 = vmatpush.bf16.xpose.msra.mxu0 0
    %543 = vmatpush.bf16.xpose.msra.mxu0 0
    %544 = vmatpush.bf16.xpose.msra.mxu0 0
    %545 = vmatpush.bf16.xpose.msra.mxu0 %v418
    %546 = vmatmul.bf16.gmra.mxu0 %v536
    %v547 = vpop.f32.mrf.mxu0
    %v548 = vadd.f32 %v51, %v547
    %v549 = vpop.f32.mrf.mxu0
    %550 = vdwg.mxu0
    %551 = vrot.lane.b32.xlu0 %v215, 80
    %v552 = vpop.permute.xlu0 %551
    %v554 = vsel %vm193, %v552, 0
    %556 = vmatpush.bf16.xpose.msra.mxu0 0
    %557 = vmatpush.bf16.xpose.msra.mxu0 0
    %558 = vmatpush.bf16.xpose.msra.mxu0 0
    %559 = vmatpush.bf16.xpose.msra.mxu0 0
    %560 = vmatpush.bf16.xpose.msra.mxu0 0
    %561 = vmatpush.bf16.xpose.msra.mxu0 0
    %562 = vmatpush.bf16.xpose.msra.mxu0 0
    %563 = vmatpush.bf16.xpose.msra.mxu0 %v441
    %564 = vmatmul.bf16.gmra.mxu0 %v554
    %v565 = vpop.f32.mrf.mxu0
    %v566 = vadd.f32 %v51, %v565
    %v567 = vpop.f32.mrf.mxu0
    %568 = vdwg.mxu0
    %v569 = vsel %vm237, %v548, -inf
    %570 = vmax.xlane.f32.xlu0 %v569
    %v571 = vpop.xlane.xlu0 %570
    %v572 = vsel %vm237, %v566, -inf
    %573 = vmax.xlane.f32.xlu0 %v572
    %v574 = vpop.xlane.xlu0 %573
    %v575 = vsub.f32 %v548, %v571
    %v576 = vsub.f32 %v566, %v574
    %v577 = vmul.f32 %v575, 1.442695
    %v578 = vpow.pop %v577
    %v579 = vmul.f32 %v576, 1.442695
    %v580 = vpow.pop %v579
    %v581 = vsel %vm237, %v578, 0.0
    %582 = vadd.xlane.f32.xlu0 %v581
    %v583 = vpop.xlane.xlu0 %582
    %v584 = vsel %vm237, %v580, 0.0
    %585 = vadd.xlane.f32.xlu0 %v584
    %v586 = vpop.xlane.xlu0 %585
    %v587 = vrcp.pop %v583
    %v588 = vrcp.pop %v586
    %v589 = vmul.f32 %v578, %v587
    %v590 = vmul.f32 %v580, %v588
    %v591 = vpack.c.bf16 %v589, %v589
    %v592 = vpack.c.bf16 %v590, %v590
    %v594 = vsel %vm237, %v591, 0
    %596 = vmatpush.bf16.msra.mxu0 0
    %597 = vmatpush.bf16.msra.mxu0 0
    %598 = vmatpush.bf16.msra.mxu0 0
    %599 = vmatpush.bf16.msra.mxu0 0
    %600 = vmatpush.bf16.msra.mxu0 0
    %601 = vmatpush.bf16.msra.mxu0 0
    %602 = vmatpush.bf16.msra.mxu0 0
    %603 = vmatpush.bf16.msra.mxu0 %v486
    %604 = vmatmul.bf16.gmra.mxu0 %v594
    %v605 = vpop.f32.mrf.mxu0
    %v606 = vadd.f32 0.0, %v605
    %v607 = vpop.f32.mrf.mxu0
    %608 = vdwg.mxu0
    %v610 = vsel %vm237, %v592, 0
    %612 = vmatpush.bf16.msra.mxu0 0
    %613 = vmatpush.bf16.msra.mxu0 0
    %614 = vmatpush.bf16.msra.mxu0 0
    %615 = vmatpush.bf16.msra.mxu0 0
    %616 = vmatpush.bf16.msra.mxu0 0
    %617 = vmatpush.bf16.msra.mxu0 0
    %618 = vmatpush.bf16.msra.mxu0 0
    %619 = vmatpush.bf16.msra.mxu0 %v507
    %620 = vmatmul.bf16.gmra.mxu0 %v610
    %v621 = vpop.f32.mrf.mxu0
    %v622 = vadd.f32 0.0, %v621
    %v623 = vpop.f32.mrf.mxu0
    %624 = vdwg.mxu0
    %627 = vrot.lane.b32.xlu0 %v606, 48
    %v628 = vpop.permute.xlu0 %627
    %629 = vrot.lane.b32.xlu0 %v622, 48
    %v630 = vpop.permute.xlu0 %629
    %vm633 = vcmask 523648
    %634 = vst.msk [vmem:[#allocation2] sm:$0xff] %vm633, %v628
    %635 = vst.msk [vmem:[#allocation2 + $0x8] sm:$0xff] %vm633, %v630
    %v636 = vld [vmem:[#allocation2] sm:$0xff]
    %v637 = vld [vmem:[#allocation2 + $0x8] sm:$0xff]
    %v638 = vpack.c.bf16 %v637, %v636
    %v639 = vld [vmem:[%s4] sm:$0xf]
    %v640 = vld [vmem:[%s4 + $0x4] sm:$0xf]
    %v641 = vld [vmem:[%s4 + $0x8] sm:$0xf]
    %v642 = vld [vmem:[%s4 + $0xc] sm:$0xf]
    %v643 = vld [vmem:[%s4 + $0x10] sm:$0xf]
    %v644 = vld [vmem:[%s4 + $0x14] sm:$0xf]
    %v645 = vld [vmem:[%s4 + $0x18] sm:$0xf]
    %v646 = vld [vmem:[%s4 + $0x1c] sm:$0xf]
    %v655 = vunpack.c.l.b16 %v639
    %v656 = vunpack.c.l.b16 %v640
    %v657 = vunpack.c.l.b16 %v641
    %v658 = vunpack.c.l.b16 %v642
    %v659 = vunpack.c.l.b16 %v643
    %v660 = vunpack.c.l.b16 %v644
    %v661 = vunpack.c.l.b16 %v645
    %v662 = vunpack.c.l.b16 %v646
    %v663 = vpack.c.b16 %v656, %v655
    %v664 = vpack.c.b16 %v658, %v657
    %v665 = vpack.c.b16 %v660, %v659
    %v666 = vpack.c.b16 %v662, %v661
    %v672 = vsel %vm55, %v638, 0
    %674 = vmatpush.bf16.msra.mxu0 0
    %675 = vmatpush.bf16.msra.mxu0 0
    %676 = vmatpush.bf16.msra.mxu0 0
    %677 = vmatpush.bf16.msra.mxu0 0
    %678 = vmatpush.bf16.msra.mxu0 %v666
    %679 = vmatpush.bf16.msra.mxu0 %v665
    %680 = vmatpush.bf16.msra.mxu0 %v664
    %681 = vmatpush.bf16.msra.mxu0 %v663
    %682 = vmatmul.bf16.gmra.mxu0 %v672
    %v683 = vpop.f32.mrf.mxu0
    %v684 = vadd.f32 0.0, %v683
    %v685 = vpop.f32.mrf.mxu0
    %v686 = vadd.f32 0.0, %v685
    %687 = vdwg.mxu0
    %v688 = vadd.f32 %v40, %v684
    %v689 = vadd.f32 %v41, %v686
    %v690 = vld [vmem:[%s2] sm:$0x1]
    %v691 = vmul.f32 %v688, %v688
    %v692 = vmul.f32 %v689, %v689
    %v693 = vsel %vm55, %v691, 0.0
    %694 = vadd.xlane.f32.xlu0 %v693
    %v695 = vpop.xlane.xlu0 %694
    %v696 = vsel %vm55, %v692, 0.0
    %697 = vadd.xlane.f32.xlu0 %v696
    %v698 = vpop.xlane.xlu0 %697
    %v699 = vmul.f32 %v695, %v68
    %v700 = vmul.f32 %v698, %v68
    %v701 = vadd.f32 %v699, 1e-05
    %v702 = vadd.f32 %v700, 1e-05
    %v703 = vrsqrt.pop %v701
    %v704 = vmul.f32 %v703, %v701
    %v705 = vmul.f32 %v704, %v703
    %v706 = vmul.f32 0.5, %v705
    %v707 = vsub.f32 1.5, %v706
    %v708 = vmul.f32 %v703, %v707
    %vm709 = vweird.f32 %v701
    %vm710 = vweird.f32 %v703
    %vm711 = vmor %vm709, %vm710
    %v712 = vsel %vm711, %v703, %v708
    %v713 = vrsqrt.pop %v702
    %v714 = vmul.f32 %v713, %v702
    %v715 = vmul.f32 %v714, %v713
    %v716 = vmul.f32 0.5, %v715
    %v717 = vsub.f32 1.5, %v716
    %v718 = vmul.f32 %v713, %v717
    %vm719 = vweird.f32 %v702
    %vm720 = vweird.f32 %v713
    %vm721 = vmor %vm719, %vm720
    %v722 = vsel %vm721, %v713, %v718
    %v723 = vmul.f32 %v688, %v712
    %v724 = vmul.f32 %v689, %v722
    %v726 = vperm.slane %v690, 0
    %v728 = vmul.f32 %v723, %v726
    %v729 = vmul.f32 %v724, %v726
    %v730 = vpack.c.bf16 %v729, %v728
    %v731 = vld [vmem:[%s5] sm:$0xff]
    %v732 = vld [vmem:[%s5 + $0x8] sm:$0xff]
    %v733 = vld [vmem:[%s5 + $0x10] sm:$0xff]
    %v734 = vld [vmem:[%s5 + $0x18] sm:$0xff]
    %v735 = vld [vmem:[%s5 + $0x20] sm:$0xff]
    %v736 = vld [vmem:[%s5 + $0x28] sm:$0xff]
    %v737 = vld [vmem:[%s5 + $0x30] sm:$0xff]
    %v738 = vld [vmem:[%s5 + $0x38] sm:$0xff]
    %v747 = vunpack.c.l.b16 %v731
    %v748 = vunpack.c.h.b16 %v731
    %v749 = vunpack.c.l.b16 %v732
    %v750 = vunpack.c.h.b16 %v732
    %v751 = vunpack.c.l.b16 %v733
    %v752 = vunpack.c.h.b16 %v733
    %v753 = vunpack.c.l.b16 %v734
    %v754 = vunpack.c.h.b16 %v734
    %v755 = vunpack.c.l.b16 %v735
    %v756 = vunpack.c.h.b16 %v735
    %v757 = vunpack.c.l.b16 %v736
    %v758 = vunpack.c.h.b16 %v736
    %v759 = vunpack.c.l.b16 %v737
    %v760 = vunpack.c.h.b16 %v737
    %v761 = vunpack.c.l.b16 %v738
    %v762 = vunpack.c.h.b16 %v738
    %v763 = vpack.c.b16 %v749, %v747
    %v764 = vpack.c.b16 %v750, %v748
    %v765 = vpack.c.b16 %v753, %v751
    %v766 = vpack.c.b16 %v754, %v752
    %v767 = vpack.c.b16 %v757, %v755
    %v768 = vpack.c.b16 %v758, %v756
    %v769 = vpack.c.b16 %v761, %v759
    %v770 = vpack.c.b16 %v762, %v760
    %v780 = vsel %vm55, %v730, 0
    %782 = vmatpush.bf16.msra.mxu0 0
    %783 = vmatpush.bf16.msra.mxu0 0
    %784 = vmatpush.bf16.msra.mxu0 0
    %785 = vmatpush.bf16.msra.mxu0 0
    %786 = vmatpush.bf16.msra.mxu0 %v769
    %787 = vmatpush.bf16.msra.mxu0 %v767
    %788 = vmatpush.bf16.msra.mxu0 %v765
    %789 = vmatpush.bf16.msra.mxu0 %v763
    %790 = vmatmul.bf16.gmra.mxu0 %v780
    %v791 = vpop.f32.mrf.mxu0
    %v792 = vadd.f32 0.0, %v791
    %v793 = vpop.f32.mrf.mxu0
    %v794 = vadd.f32 0.0, %v793
    %795 = vdwg.mxu0
    %796 = vmatpush.bf16.msra.mxu0 0
    %797 = vmatpush.bf16.msra.mxu0 0
    %798 = vmatpush.bf16.msra.mxu0 0
    %799 = vmatpush.bf16.msra.mxu0 0
    %800 = vmatpush.bf16.msra.mxu0 %v770
    %801 = vmatpush.bf16.msra.mxu0 %v768
    %802 = vmatpush.bf16.msra.mxu0 %v766
    %803 = vmatpush.bf16.msra.mxu0 %v764
    %804 = vmatmul.bf16.gmra.mxu0 %v780
    %v805 = vpop.f32.mrf.mxu0
    %v806 = vadd.f32 0.0, %v805
    %v807 = vpop.f32.mrf.mxu0
    %v808 = vadd.f32 0.0, %v807
    %809 = vdwg.mxu0
    %v810 = vxor.u32 %v792, 2147483648
    %v811 = vxor.u32 %v794, 2147483648
    %v812 = vmul.f32 %v810, 1.442695
    %v813 = vpow.pop %v812
    %v814 = vmul.f32 %v811, 1.442695
    %v815 = vpow.pop %v814
    %v816 = vadd.f32 %v813, 1.0
    %v817 = vadd.f32 %v815, 1.0
    %v818 = vrcp.pop %v816
    %v819 = vmul.f32 %v816, %v818
    %v820 = vsub.f32 1.0, %v819
    %v821 = vmul.f32 %v818, %v820
    %v822 = vadd.f32 %v818, %v821
    %vm823 = vweird.f32 %v816
    %vm824 = vweird.f32 %v818
    %vm825 = vmor %vm823, %vm824
    %v826 = vsel %vm825, %v818, %v822
    %v827 = vand.u32 2147483647, %v816
    %vm828 = vcmp.eq.f32.partialorder %v827, 8.507059e+37
    %v829 = vand.u32 %v816, 2147483648
    %v830 = vor.u32 1.1754944e-38, %v829
    %v831 = vsel %vm828, %v830, %v826
    %v832 = vmul.f32 1.0, %v831
    %v833 = vrcp.pop %v817
    %v834 = vmul.f32 %v817, %v833
    %v835 = vsub.f32 1.0, %v834
    %v836 = vmul.f32 %v833, %v835
    %v837 = vadd.f32 %v833, %v836
    %vm838 = vweird.f32 %v817
    %vm839 = vweird.f32 %v833
    %vm840 = vmor %vm838, %vm839
    %v841 = vsel %vm840, %v833, %v837
    %v842 = vand.u32 2147483647, %v817
    %vm843 = vcmp.eq.f32.partialorder %v842, 8.507059e+37
    %v844 = vand.u32 %v817, 2147483648
    %v845 = vor.u32 1.1754944e-38, %v844
    %v846 = vsel %vm843, %v845, %v841
    %v847 = vmul.f32 1.0, %v846
    %v848 = vmul.f32 %v792, %v832
    %v849 = vmul.f32 %v794, %v847
    %v850 = vmul.f32 %v848, %v806
    %v851 = vmul.f32 %v849, %v808
    %v852 = vpack.c.bf16 %v851, %v850
    %v853 = vld [vmem:[%s6] sm:$0xf]
    %v854 = vld [vmem:[%s6 + $0x4] sm:$0xf]
    %v855 = vld [vmem:[%s6 + $0x8] sm:$0xf]
    %v856 = vld [vmem:[%s6 + $0xc] sm:$0xf]
    %v857 = vld [vmem:[%s6 + $0x10] sm:$0xf]
    %v858 = vld [vmem:[%s6 + $0x14] sm:$0xf]
    %v859 = vld [vmem:[%s6 + $0x18] sm:$0xf]
    %v860 = vld [vmem:[%s6 + $0x1c] sm:$0xf]
    %v861 = vld [vmem:[%s6 + $0x20] sm:$0xf]
    %v862 = vld [vmem:[%s6 + $0x24] sm:$0xf]
    %v863 = vld [vmem:[%s6 + $0x28] sm:$0xf]
    %v864 = vld [vmem:[%s6 + $0x2c] sm:$0xf]
    %v865 = vld [vmem:[%s6 + $0x30] sm:$0xf]
    %v866 = vld [vmem:[%s6 + $0x34] sm:$0xf]
    %v867 = vld [vmem:[%s6 + $0x38] sm:$0xf]
    %v868 = vld [vmem:[%s6 + $0x3c] sm:$0xf]
    %v885 = vunpack.c.l.b16 %v853
    %v886 = vunpack.c.l.b16 %v854
    %v887 = vunpack.c.l.b16 %v855
    %v888 = vunpack.c.l.b16 %v856
    %v889 = vunpack.c.l.b16 %v857
    %v890 = vunpack.c.l.b16 %v858
    %v891 = vunpack.c.l.b16 %v859
    %v892 = vunpack.c.l.b16 %v860
    %v893 = vunpack.c.l.b16 %v861
    %v894 = vunpack.c.l.b16 %v862
    %v895 = vunpack.c.l.b16 %v863
    %v896 = vunpack.c.l.b16 %v864
    %v897 = vunpack.c.l.b16 %v865
    %v898 = vunpack.c.l.b16 %v866
    %v899 = vunpack.c.l.b16 %v867
    %v900 = vunpack.c.l.b16 %v868
    %v901 = vpack.c.b16 %v886, %v885
    %v902 = vpack.c.b16 %v888, %v887
    %v903 = vpack.c.b16 %v890, %v889
    %v904 = vpack.c.b16 %v892, %v891
    %v905 = vpack.c.b16 %v894, %v893
    %v906 = vpack.c.b16 %v896, %v895
    %v907 = vpack.c.b16 %v898, %v897
    %v908 = vpack.c.b16 %v900, %v899
    %917 = vmatpush.bf16.msra.mxu0 %v908
    %918 = vmatpush.bf16.msra.mxu0 %v907
    %919 = vmatpush.bf16.msra.mxu0 %v906
    %920 = vmatpush.bf16.msra.mxu0 %v905
    %921 = vmatpush.bf16.msra.mxu0 %v904
    %922 = vmatpush.bf16.msra.mxu0 %v903
    %923 = vmatpush.bf16.msra.mxu0 %v902
    %924 = vmatpush.bf16.msra.mxu0 %v901
    %925 = vmatmul.bf16.gmra.mxu0 %v852
    %v926 = vpop.f32.mrf.mxu0
    %v927 = vadd.f32 0.0, %v926
    %v928 = vpop.f32.mrf.mxu0
    %v929 = vadd.f32 0.0, %v928
    %930 = vdwg.mxu0
    %v931 = vadd.f32 %v688, %v927
    %v932 = vadd.f32 %v689, %v929
    %s933 = scalar_lea.vmem %s1, 1
    %v934 = vld [vmem:[%s933] sm:$0x1]
    %v935 = vmul.f32 %v931, %v931
    %v936 = vmul.f32 %v932, %v932
    %v937 = vsel %vm55, %v935, 0.0
    %938 = vadd.xlane.f32.xlu0 %v937
    %v939 = vpop.xlane.xlu0 %938
    %v940 = vsel %vm55, %v936, 0.0
    %941 = vadd.xlane.f32.xlu0 %v940
    %v942 = vpop.xlane.xlu0 %941
    %v943 = vmul.f32 %v939, %v68
    %v944 = vmul.f32 %v942, %v68
    %v945 = vadd.f32 %v943, 1e-05
    %v946 = vadd.f32 %v944, 1e-05
    %v947 = vrsqrt.pop %v945
    %v948 = vmul.f32 %v947, %v945
    %v949 = vmul.f32 %v948, %v947
    %v950 = vmul.f32 0.5, %v949
    %v951 = vsub.f32 1.5, %v950
    %v952 = vmul.f32 %v947, %v951
    %vm953 = vweird.f32 %v945
    %vm954 = vweird.f32 %v947
    %vm955 = vmor %vm953, %vm954
    %v956 = vsel %vm955, %v947, %v952
    %v957 = vrsqrt.pop %v946
    %v958 = vmul.f32 %v957, %v946
    %v959 = vmul.f32 %v958, %v957
    %v960 = vmul.f32 0.5, %v959
    %v961 = vsub.f32 1.5, %v960
    %v962 = vmul.f32 %v957, %v961
    %vm963 = vweird.f32 %v946
    %vm964 = vweird.f32 %v957
    %vm965 = vmor %vm963, %vm964
    %v966 = vsel %vm965, %v957, %v962
    %v967 = vmul.f32 %v931, %v956
    %v968 = vmul.f32 %v932, %v966
    %v970 = vperm.slane %v934, 0
    %v972 = vmul.f32 %v967, %v970
    %v973 = vmul.f32 %v968, %v970
    %v974 = vpack.c.bf16 %v973, %v972
    %s975 = scalar_lea.vmem %s3, 64
    %v976 = vld [vmem:[%s975] sm:$0xff]
    %v977 = vld [vmem:[%s975 + $0x8] sm:$0xff]
    %v978 = vld [vmem:[%s975 + $0x10] sm:$0xff]
    %v979 = vld [vmem:[%s975 + $0x18] sm:$0xff]
    %v980 = vld [vmem:[%s975 + $0x20] sm:$0xff]
    %v981 = vld [vmem:[%s975 + $0x28] sm:$0xff]
    %v982 = vld [vmem:[%s975 + $0x30] sm:$0xff]
    %v983 = vld [vmem:[%s975 + $0x38] sm:$0xff]
    %v992 = vunpack.c.l.b16 %v976
    %v993 = vunpack.c.h.b16 %v976
    %v994 = vunpack.c.l.b16 %v977
    %v995 = vunpack.c.h.b16 %v977
    %v996 = vunpack.c.l.b16 %v978
    %v997 = vunpack.c.h.b16 %v978
    %v998 = vunpack.c.l.b16 %v979
    %v999 = vunpack.c.h.b16 %v979
    %v1000 = vunpack.c.l.b16 %v980
    %v1001 = vunpack.c.h.b16 %v980
    %v1002 = vunpack.c.l.b16 %v981
    %v1003 = vunpack.c.h.b16 %v981
    %v1004 = vunpack.c.l.b16 %v982
    %v1005 = vunpack.c.h.b16 %v982
    %v1006 = vunpack.c.l.b16 %v983
    %v1007 = vunpack.c.h.b16 %v983
    %v1008 = vpack.c.b16 %v994, %v992
    %v1009 = vpack.c.b16 %v995, %v993
    %v1010 = vpack.c.b16 %v998, %v996
    %v1011 = vpack.c.b16 %v999, %v997
    %v1012 = vpack.c.b16 %v1002, %v1000
    %v1013 = vpack.c.b16 %v1003, %v1001
    %v1014 = vpack.c.b16 %v1006, %v1004
    %v1015 = vpack.c.b16 %v1007, %v1005
    %v1025 = vsel %vm55, %v974, 0
    %1027 = vmatpush.bf16.msra.mxu0 0
    %1028 = vmatpush.bf16.msra.mxu0 0
    %1029 = vmatpush.bf16.msra.mxu0 0
    %1030 = vmatpush.bf16.msra.mxu0 0
    %1031 = vmatpush.bf16.msra.mxu0 %v1014
    %1032 = vmatpush.bf16.msra.mxu0 %v1012
    %1033 = vmatpush.bf16.msra.mxu0 %v1010
    %1034 = vmatpush.bf16.msra.mxu0 %v1008
    %1035 = vmatmul.bf16.gmra.mxu0 %v1025
    %v1036 = vpop.f32.mrf.mxu0
    %v1037 = vadd.f32 0.0, %v1036
    %v1038 = vpop.f32.mrf.mxu0
    %v1039 = vadd.f32 0.0, %v1038
    %1040 = vdwg.mxu0
    %1041 = vmatpush.bf16.msra.mxu0 0
    %1042 = vmatpush.bf16.msra.mxu0 0
    %1043 = vmatpush.bf16.msra.mxu0 0
    %1044 = vmatpush.bf16.msra.mxu0 0
    %1045 = vmatpush.bf16.msra.mxu0 %v1015
    %1046 = vmatpush.bf16.msra.mxu0 %v1013
    %1047 = vmatpush.bf16.msra.mxu0 %v1011
    %1048 = vmatpush.bf16.msra.mxu0 %v1009
    %1049 = vmatmul.bf16.gmra.mxu0 %v1025
    %v1050 = vpop.f32.mrf.mxu0
    %v1051 = vadd.f32 0.0, %v1050
    %v1052 = vpop.f32.mrf.mxu0
    %v1053 = vadd.f32 0.0, %v1052
    %1054 = vdwg.mxu0
    %v1055 = vmul.f32 %v1037, %v42
    %v1056 = vmul.f32 %v1039, %v43
    %v1057 = vmul.f32 %v1051, %v44
    %v1058 = vmul.f32 %v1053, %v45
    %v1059 = vadd.f32 %v1055, %v1057
    %v1060 = vadd.f32 %v1056, %v1058
    %v1061 = vpack.c.bf16 %v1059, %v1059
    %v1062 = vpack.c.bf16 %v1060, %v1060
    %v1064 = vunpack.c.l.b16 %v1061
    %v1065 = vpack.c.b16 %v1064, %v1064
    %1066 = vrot.lane.b32.xlu0 %v1065, 64
    %v1067 = vpop.permute.xlu0 %1066
    %v1069 = vsel %vm193, %v1061, 0
    %v1072 = vsel %vm193, %v1067, 0
    %1074 = vmatpush.bf16.xpose.msra.mxu0 0
    %1075 = vmatpush.bf16.xpose.msra.mxu0 0
    %1076 = vmatpush.bf16.xpose.msra.mxu0 0
    %1077 = vmatpush.bf16.xpose.msra.mxu0 0
    %1078 = vmatpush.bf16.xpose.msra.mxu0 0
    %1079 = vmatpush.bf16.xpose.msra.mxu0 0
    %1080 = vmatpush.bf16.xpose.msra.mxu0 0
    %1081 = vmatpush.bf16.xpose.msra.mxu0 %v1072
    %1082 = vmatmul.bf16.gmra.mxu0 %v1069
    %v1083 = vpop.f32.mrf.mxu0
    %v1084 = vadd.f32 %v51, %v1083
    %v1085 = vpop.f32.mrf.mxu0
    %1086 = vdwg.mxu0
    %v1088 = vunpack.c.l.b16 %v1062
    %v1089 = vpack.c.b16 %v1088, %v1088
    %1090 = vrot.lane.b32.xlu0 %v1089, 64
    %v1091 = vpop.permute.xlu0 %1090
    %v1093 = vsel %vm193, %v1062, 0
    %v1096 = vsel %vm193, %v1091, 0
    %1098 = vmatpush.bf16.xpose.msra.mxu0 0
    %1099 = vmatpush.bf16.xpose.msra.mxu0 0
    %1100 = vmatpush.bf16.xpose.msra.mxu0 0
    %1101 = vmatpush.bf16.xpose.msra.mxu0 0
    %1102 = vmatpush.bf16.xpose.msra.mxu0 0
    %1103 = vmatpush.bf16.xpose.msra.mxu0 0
    %1104 = vmatpush.bf16.xpose.msra.mxu0 0
    %1105 = vmatpush.bf16.xpose.msra.mxu0 %v1096
    %1106 = vmatmul.bf16.gmra.mxu0 %v1093
    %v1107 = vpop.f32.mrf.mxu0
    %v1108 = vadd.f32 %v51, %v1107
    %v1109 = vpop.f32.mrf.mxu0
    %1110 = vdwg.mxu0
    %v1111 = vsel %vm237, %v1084, -inf
    %1112 = vmax.xlane.f32.xlu0 %v1111
    %v1113 = vpop.xlane.xlu0 %1112
    %v1114 = vsel %vm237, %v1108, -inf
    %1115 = vmax.xlane.f32.xlu0 %v1114
    %v1116 = vpop.xlane.xlu0 %1115
    %v1117 = vsub.f32 %v1084, %v1113
    %v1118 = vsub.f32 %v1108, %v1116
    %v1119 = vmul.f32 %v1117, 1.442695
    %v1120 = vpow.pop %v1119
    %v1121 = vmul.f32 %v1118, 1.442695
    %v1122 = vpow.pop %v1121
    %v1123 = vsel %vm237, %v1120, 0.0
    %1124 = vadd.xlane.f32.xlu0 %v1123
    %v1125 = vpop.xlane.xlu0 %1124
    %v1126 = vsel %vm237, %v1122, 0.0
    %1127 = vadd.xlane.f32.xlu0 %v1126
    %v1128 = vpop.xlane.xlu0 %1127
    %v1129 = vrcp.pop %v1125
    %v1130 = vrcp.pop %v1128
    %v1131 = vmul.f32 %v1120, %v1129
    %v1132 = vmul.f32 %v1122, %v1130
    %v1133 = vpack.c.bf16 %v1131, %v1131
    %v1134 = vpack.c.bf16 %v1132, %v1132
    %1135 = vrot.lane.b32.xlu0 %v1065, 32
    %v1136 = vpop.permute.xlu0 %1135
    %v1138 = vsel %vm237, %v1133, 0
    %v1141 = vsel %vm267, %v1136, 0
    %1143 = vmatpush.bf16.msra.mxu0 0
    %1144 = vmatpush.bf16.msra.mxu0 0
    %1145 = vmatpush.bf16.msra.mxu0 0
    %1146 = vmatpush.bf16.msra.mxu0 0
    %1147 = vmatpush.bf16.msra.mxu0 0
    %1148 = vmatpush.bf16.msra.mxu0 0
    %1149 = vmatpush.bf16.msra.mxu0 0
    %1150 = vmatpush.bf16.msra.mxu0 %v1141
    %1151 = vmatmul.bf16.gmra.mxu0 %v1138
    %v1152 = vpop.f32.mrf.mxu0
    %v1153 = vadd.f32 0.0, %v1152
    %v1154 = vpop.f32.mrf.mxu0
    %1155 = vdwg.mxu0
    %1156 = vrot.lane.b32.xlu0 %v1089, 32
    %v1157 = vpop.permute.xlu0 %1156
    %v1159 = vsel %vm237, %v1134, 0
    %v1162 = vsel %vm267, %v1157, 0
    %1164 = vmatpush.bf16.msra.mxu0 0
    %1165 = vmatpush.bf16.msra.mxu0 0
    %1166 = vmatpush.bf16.msra.mxu0 0
    %1167 = vmatpush.bf16.msra.mxu0 0
    %1168 = vmatpush.bf16.msra.mxu0 0
    %1169 = vmatpush.bf16.msra.mxu0 0
    %1170 = vmatpush.bf16.msra.mxu0 0
    %1171 = vmatpush.bf16.msra.mxu0 %v1162
    %1172 = vmatmul.bf16.gmra.mxu0 %v1159
    %v1173 = vpop.f32.mrf.mxu0
    %v1174 = vadd.f32 0.0, %v1173
    %v1175 = vpop.f32.mrf.mxu0
    %1176 = vdwg.mxu0
    %1177 = vst.msk [vmem:[#allocation2] sm:$0xff] %vm193, %v1153
    %1178 = vst.msk [vmem:[#allocation2 + $0x8] sm:$0xff] %vm193, %v1174
    %1179 = vrot.lane.b32.xlu0 %v1065, 112
    %v1180 = vpop.permute.xlu0 %1179
    %v1182 = vsel %vm193, %v1180, 0
    %1184 = vmatpush.bf16.xpose.msra.mxu0 0
    %1185 = vmatpush.bf16.xpose.msra.mxu0 0
    %1186 = vmatpush.bf16.xpose.msra.mxu0 0
    %1187 = vmatpush.bf16.xpose.msra.mxu0 0
    %1188 = vmatpush.bf16.xpose.msra.mxu0 0
    %1189 = vmatpush.bf16.xpose.msra.mxu0 0
    %1190 = vmatpush.bf16.xpose.msra.mxu0 0
    %1191 = vmatpush.bf16.xpose.msra.mxu0 %v1072
    %1192 = vmatmul.bf16.gmra.mxu0 %v1182
    %v1193 = vpop.f32.mrf.mxu0
    %v1194 = vadd.f32 %v51, %v1193
    %v1195 = vpop.f32.mrf.mxu0
    %1196 = vdwg.mxu0
    %1197 = vrot.lane.b32.xlu0 %v1089, 112
    %v1198 = vpop.permute.xlu0 %1197
    %v1200 = vsel %vm193, %v1198, 0
    %1202 = vmatpush.bf16.xpose.msra.mxu0 0
    %1203 = vmatpush.bf16.xpose.msra.mxu0 0
    %1204 = vmatpush.bf16.xpose.msra.mxu0 0
    %1205 = vmatpush.bf16.xpose.msra.mxu0 0
    %1206 = vmatpush.bf16.xpose.msra.mxu0 0
    %1207 = vmatpush.bf16.xpose.msra.mxu0 0
    %1208 = vmatpush.bf16.xpose.msra.mxu0 0
    %1209 = vmatpush.bf16.xpose.msra.mxu0 %v1096
    %1210 = vmatmul.bf16.gmra.mxu0 %v1200
    %v1211 = vpop.f32.mrf.mxu0
    %v1212 = vadd.f32 %v51, %v1211
    %v1213 = vpop.f32.mrf.mxu0
    %1214 = vdwg.mxu0
    %v1215 = vsel %vm237, %v1194, -inf
    %1216 = vmax.xlane.f32.xlu0 %v1215
    %v1217 = vpop.xlane.xlu0 %1216
    %v1218 = vsel %vm237, %v1212, -inf
    %1219 = vmax.xlane.f32.xlu0 %v1218
    %v1220 = vpop.xlane.xlu0 %1219
    %v1221 = vsub.f32 %v1194, %v1217
    %v1222 = vsub.f32 %v1212, %v1220
    %v1223 = vmul.f32 %v1221, 1.442695
    %v1224 = vpow.pop %v1223
    %v1225 = vmul.f32 %v1222, 1.442695
    %v1226 = vpow.pop %v1225
    %v1227 = vsel %vm237, %v1224, 0.0
    %1228 = vadd.xlane.f32.xlu0 %v1227
    %v1229 = vpop.xlane.xlu0 %1228
    %v1230 = vsel %vm237, %v1226, 0.0
    %1231 = vadd.xlane.f32.xlu0 %v1230
    %v1232 = vpop.xlane.xlu0 %1231
    %v1233 = vrcp.pop %v1229
    %v1234 = vrcp.pop %v1232
    %v1235 = vmul.f32 %v1224, %v1233
    %v1236 = vmul.f32 %v1226, %v1234
    %v1237 = vpack.c.bf16 %v1235, %v1235
    %v1238 = vpack.c.bf16 %v1236, %v1236
    %v1240 = vsel %vm237, %v1237, 0
    %1242 = vmatpush.bf16.msra.mxu0 0
    %1243 = vmatpush.bf16.msra.mxu0 0
    %1244 = vmatpush.bf16.msra.mxu0 0
    %1245 = vmatpush.bf16.msra.mxu0 0
    %1246 = vmatpush.bf16.msra.mxu0 0
    %1247 = vmatpush.bf16.msra.mxu0 0
    %1248 = vmatpush.bf16.msra.mxu0 0
    %1249 = vmatpush.bf16.msra.mxu0 %v1141
    %1250 = vmatmul.bf16.gmra.mxu0 %v1240
    %v1251 = vpop.f32.mrf.mxu0
    %v1252 = vadd.f32 0.0, %v1251
    %v1253 = vpop.f32.mrf.mxu0
    %1254 = vdwg.mxu0
    %v1256 = vsel %vm237, %v1238, 0
    %1258 = vmatpush.bf16.msra.mxu0 0
    %1259 = vmatpush.bf16.msra.mxu0 0
    %1260 = vmatpush.bf16.msra.mxu0 0
    %1261 = vmatpush.bf16.msra.mxu0 0
    %1262 = vmatpush.bf16.msra.mxu0 0
    %1263 = vmatpush.bf16.msra.mxu0 0
    %1264 = vmatpush.bf16.msra.mxu0 0
    %1265 = vmatpush.bf16.msra.mxu0 %v1162
    %1266 = vmatmul.bf16.gmra.mxu0 %v1256
    %v1267 = vpop.f32.mrf.mxu0
    %v1268 = vadd.f32 0.0, %v1267
    %v1269 = vpop.f32.mrf.mxu0
    %1270 = vdwg.mxu0
    %1273 = vrot.lane.b32.xlu0 %v1252, 16
    %v1274 = vpop.permute.xlu0 %1273
    %1275 = vrot.lane.b32.xlu0 %v1268, 16
    %v1276 = vpop.permute.xlu0 %1275
    %1279 = vst.msk [vmem:[#allocation2] sm:$0xff] %vm407, %v1274
    %1280 = vst.msk [vmem:[#allocation2 + $0x8] sm:$0xff] %vm407, %v1276
    %1281 = vrot.lane.b32.xlu0 %v1065, 96
    %v1282 = vpop.permute.xlu0 %1281
    %1283 = vrot.lane.b32.xlu0 %v1065, 48
    %v1284 = vpop.permute.xlu0 %1283
    %v1286 = vsel %vm193, %v1282, 0
    %v1289 = vsel %vm193, %v1284, 0
    %1291 = vmatpush.bf16.xpose.msra.mxu0 0
    %1292 = vmatpush.bf16.xpose.msra.mxu0 0
    %1293 = vmatpush.bf16.xpose.msra.mxu0 0
    %1294 = vmatpush.bf16.xpose.msra.mxu0 0
    %1295 = vmatpush.bf16.xpose.msra.mxu0 0
    %1296 = vmatpush.bf16.xpose.msra.mxu0 0
    %1297 = vmatpush.bf16.xpose.msra.mxu0 0
    %1298 = vmatpush.bf16.xpose.msra.mxu0 %v1289
    %1299 = vmatmul.bf16.gmra.mxu0 %v1286
    %v1300 = vpop.f32.mrf.mxu0
    %v1301 = vadd.f32 %v51, %v1300
    %v1302 = vpop.f32.mrf.mxu0
    %1303 = vdwg.mxu0
    %1304 = vrot.lane.b32.xlu0 %v1089, 96
    %v1305 = vpop.permute.xlu0 %1304
    %1306 = vrot.lane.b32.xlu0 %v1089, 48
    %v1307 = vpop.permute.xlu0 %1306
    %v1309 = vsel %vm193, %v1305, 0
    %v1312 = vsel %vm193, %v1307, 0
    %1314 = vmatpush.bf16.xpose.msra.mxu0 0
    %1315 = vmatpush.bf16.xpose.msra.mxu0 0
    %1316 = vmatpush.bf16.xpose.msra.mxu0 0
    %1317 = vmatpush.bf16.xpose.msra.mxu0 0
    %1318 = vmatpush.bf16.xpose.msra.mxu0 0
    %1319 = vmatpush.bf16.xpose.msra.mxu0 0
    %1320 = vmatpush.bf16.xpose.msra.mxu0 0
    %1321 = vmatpush.bf16.xpose.msra.mxu0 %v1312
    %1322 = vmatmul.bf16.gmra.mxu0 %v1309
    %v1323 = vpop.f32.mrf.mxu0
    %v1324 = vadd.f32 %v51, %v1323
    %v1325 = vpop.f32.mrf.mxu0
    %1326 = vdwg.mxu0
    %v1327 = vsel %vm237, %v1301, -inf
    %1328 = vmax.xlane.f32.xlu0 %v1327
    %v1329 = vpop.xlane.xlu0 %1328
    %v1330 = vsel %vm237, %v1324, -inf
    %1331 = vmax.xlane.f32.xlu0 %v1330
    %v1332 = vpop.xlane.xlu0 %1331
    %v1333 = vsub.f32 %v1301, %v1329
    %v1334 = vsub.f32 %v1324, %v1332
    %v1335 = vmul.f32 %v1333, 1.442695
    %v1336 = vpow.pop %v1335
    %v1337 = vmul.f32 %v1334, 1.442695
    %v1338 = vpow.pop %v1337
    %v1339 = vsel %vm237, %v1336, 0.0
    %1340 = vadd.xlane.f32.xlu0 %v1339
    %v1341 = vpop.xlane.xlu0 %1340
    %v1342 = vsel %vm237, %v1338, 0.0
    %1343 = vadd.xlane.f32.xlu0 %v1342
    %v1344 = vpop.xlane.xlu0 %1343
    %v1345 = vrcp.pop %v1341
    %v1346 = vrcp.pop %v1344
    %v1347 = vmul.f32 %v1336, %v1345
    %v1348 = vmul.f32 %v1338, %v1346
    %v1349 = vpack.c.bf16 %v1347, %v1347
    %v1350 = vpack.c.bf16 %v1348, %v1348
    %1351 = vrot.lane.b32.xlu0 %v1065, 16
    %v1352 = vpop.permute.xlu0 %1351
    %v1354 = vsel %vm237, %v1349, 0
    %v1357 = vsel %vm267, %v1352, 0
    %1359 = vmatpush.bf16.msra.mxu0 0
    %1360 = vmatpush.bf16.msra.mxu0 0
    %1361 = vmatpush.bf16.msra.mxu0 0
    %1362 = vmatpush.bf16.msra.mxu0 0
    %1363 = vmatpush.bf16.msra.mxu0 0
    %1364 = vmatpush.bf16.msra.mxu0 0
    %1365 = vmatpush.bf16.msra.mxu0 0
    %1366 = vmatpush.bf16.msra.mxu0 %v1357
    %1367 = vmatmul.bf16.gmra.mxu0 %v1354
    %v1368 = vpop.f32.mrf.mxu0
    %v1369 = vadd.f32 0.0, %v1368
    %v1370 = vpop.f32.mrf.mxu0
    %1371 = vdwg.mxu0
    %1372 = vrot.lane.b32.xlu0 %v1089, 16
    %v1373 = vpop.permute.xlu0 %1372
    %v1375 = vsel %vm237, %v1350, 0
    %v1378 = vsel %vm267, %v1373, 0
    %1380 = vmatpush.bf16.msra.mxu0 0
    %1381 = vmatpush.bf16.msra.mxu0 0
    %1382 = vmatpush.bf16.msra.mxu0 0
    %1383 = vmatpush.bf16.msra.mxu0 0
    %1384 = vmatpush.bf16.msra.mxu0 0
    %1385 = vmatpush.bf16.msra.mxu0 0
    %1386 = vmatpush.bf16.msra.mxu0 0
    %1387 = vmatpush.bf16.msra.mxu0 %v1378
    %1388 = vmatmul.bf16.gmra.mxu0 %v1375
    %v1389 = vpop.f32.mrf.mxu0
    %v1390 = vadd.f32 0.0, %v1389
    %v1391 = vpop.f32.mrf.mxu0
    %1392 = vdwg.mxu0
    %1395 = vrot.lane.b32.xlu0 %v1369, 32
    %v1396 = vpop.permute.xlu0 %1395
    %1397 = vrot.lane.b32.xlu0 %v1390, 32
    %v1398 = vpop.permute.xlu0 %1397
    %1401 = vst.msk [vmem:[#allocation2] sm:$0xff] %vm530, %v1396
    %1402 = vst.msk [vmem:[#allocation2 + $0x8] sm:$0xff] %vm530, %v1398
    %1403 = vrot.lane.b32.xlu0 %v1065, 80
    %v1404 = vpop.permute.xlu0 %1403
    %v1406 = vsel %vm193, %v1404, 0
    %1408 = vmatpush.bf16.xpose.msra.mxu0 0
    %1409 = vmatpush.bf16.xpose.msra.mxu0 0
    %1410 = vmatpush.bf16.xpose.msra.mxu0 0
    %1411 = vmatpush.bf16.xpose.msra.mxu0 0
    %1412 = vmatpush.bf16.xpose.msra.mxu0 0
    %1413 = vmatpush.bf16.xpose.msra.mxu0 0
    %1414 = vmatpush.bf16.xpose.msra.mxu0 0
    %1415 = vmatpush.bf16.xpose.msra.mxu0 %v1289
    %1416 = vmatmul.bf16.gmra.mxu0 %v1406
    %v1417 = vpop.f32.mrf.mxu0
    %v1418 = vadd.f32 %v51, %v1417
    %v1419 = vpop.f32.mrf.mxu0
    %1420 = vdwg.mxu0
    %1421 = vrot.lane.b32.xlu0 %v1089, 80
    %v1422 = vpop.permute.xlu0 %1421
    %v1424 = vsel %vm193, %v1422, 0
    %1426 = vmatpush.bf16.xpose.msra.mxu0 0
    %1427 = vmatpush.bf16.xpose.msra.mxu0 0
    %1428 = vmatpush.bf16.xpose.msra.mxu0 0
    %1429 = vmatpush.bf16.xpose.msra.mxu0 0
    %1430 = vmatpush.bf16.xpose.msra.mxu0 0
    %1431 = vmatpush.bf16.xpose.msra.mxu0 0
    %1432 = vmatpush.bf16.xpose.msra.mxu0 0
    %1433 = vmatpush.bf16.xpose.msra.mxu0 %v1312
    %1434 = vmatmul.bf16.gmra.mxu0 %v1424
    %v1435 = vpop.f32.mrf.mxu0
    %v1436 = vadd.f32 %v51, %v1435
    %v1437 = vpop.f32.mrf.mxu0
    %1438 = vdwg.mxu0
    %v1439 = vsel %vm237, %v1418, -inf
    %1440 = vmax.xlane.f32.xlu0 %v1439
    %v1441 = vpop.xlane.xlu0 %1440
    %v1442 = vsel %vm237, %v1436, -inf
    %1443 = vmax.xlane.f32.xlu0 %v1442
    %v1444 = vpop.xlane.xlu0 %1443
    %v1445 = vsub.f32 %v1418, %v1441
    %v1446 = vsub.f32 %v1436, %v1444
    %v1447 = vmul.f32 %v1445, 1.442695
    %v1448 = vpow.pop %v1447
    %v1449 = vmul.f32 %v1446, 1.442695
    %v1450 = vpow.pop %v1449
    %v1451 = vsel %vm237, %v1448, 0.0
    %1452 = vadd.xlane.f32.xlu0 %v1451
    %v1453 = vpop.xlane.xlu0 %1452
    %v1454 = vsel %vm237, %v1450, 0.0
    %1455 = vadd.xlane.f32.xlu0 %v1454
    %v1456 = vpop.xlane.xlu0 %1455
    %v1457 = vrcp.pop %v1453
    %v1458 = vrcp.pop %v1456
    %v1459 = vmul.f32 %v1448, %v1457
    %v1460 = vmul.f32 %v1450, %v1458
    %v1461 = vpack.c.bf16 %v1459, %v1459
    %v1462 = vpack.c.bf16 %v1460, %v1460
    %v1464 = vsel %vm237, %v1461, 0
    %1466 = vmatpush.bf16.msra.mxu0 0
    %1467 = vmatpush.bf16.msra.mxu0 0
    %1468 = vmatpush.bf16.msra.mxu0 0
    %1469 = vmatpush.bf16.msra.mxu0 0
    %1470 = vmatpush.bf16.msra.mxu0 0
    %1471 = vmatpush.bf16.msra.mxu0 0
    %1472 = vmatpush.bf16.msra.mxu0 0
    %1473 = vmatpush.bf16.msra.mxu0 %v1357
    %1474 = vmatmul.bf16.gmra.mxu0 %v1464
    %v1475 = vpop.f32.mrf.mxu0
    %v1476 = vadd.f32 0.0, %v1475
    %v1477 = vpop.f32.mrf.mxu0
    %1478 = vdwg.mxu0
    %v1480 = vsel %vm237, %v1462, 0
    %1482 = vmatpush.bf16.msra.mxu0 0
    %1483 = vmatpush.bf16.msra.mxu0 0
    %1484 = vmatpush.bf16.msra.mxu0 0
    %1485 = vmatpush.bf16.msra.mxu0 0
    %1486 = vmatpush.bf16.msra.mxu0 0
    %1487 = vmatpush.bf16.msra.mxu0 0
    %1488 = vmatpush.bf16.msra.mxu0 0
    %1489 = vmatpush.bf16.msra.mxu0 %v1378
    %1490 = vmatmul.bf16.gmra.mxu0 %v1480
    %v1491 = vpop.f32.mrf.mxu0
    %v1492 = vadd.f32 0.0, %v1491
    %v1493 = vpop.f32.mrf.mxu0
    %1494 = vdwg.mxu0
    %1497 = vrot.lane.b32.xlu0 %v1476, 48
    %v1498 = vpop.permute.xlu0 %1497
    %1499 = vrot.lane.b32.xlu0 %v1492, 48
    %v1500 = vpop.permute.xlu0 %1499
    %1503 = vst.msk [vmem:[#allocation2] sm:$0xff] %vm633, %v1498
    %1504 = vst.msk [vmem:[#allocation2 + $0x8] sm:$0xff] %vm633, %v1500
    %v1505 = vld [vmem:[#allocation2] sm:$0xff]
    %v1506 = vld [vmem:[#allocation2 + $0x8] sm:$0xff]
    %v1507 = vpack.c.bf16 %v1506, %v1505
    %s1508 = scalar_lea.vmem %s4, 32
    %v1509 = vld [vmem:[%s1508] sm:$0xf]
    %v1510 = vld [vmem:[%s1508 + $0x4] sm:$0xf]
    %v1511 = vld [vmem:[%s1508 + $0x8] sm:$0xf]
    %v1512 = vld [vmem:[%s1508 + $0xc] sm:$0xf]
    %v1513 = vld [vmem:[%s1508 + $0x10] sm:$0xf]
    %v1514 = vld [vmem:[%s1508 + $0x14] sm:$0xf]
    %v1515 = vld [vmem:[%s1508 + $0x18] sm:$0xf]
    %v1516 = vld [vmem:[%s1508 + $0x1c] sm:$0xf]
    %v1525 = vunpack.c.l.b16 %v1509
    %v1526 = vunpack.c.l.b16 %v1510
    %v1527 = vunpack.c.l.b16 %v1511
    %v1528 = vunpack.c.l.b16 %v1512
    %v1529 = vunpack.c.l.b16 %v1513
    %v1530 = vunpack.c.l.b16 %v1514
    %v1531 = vunpack.c.l.b16 %v1515
    %v1532 = vunpack.c.l.b16 %v1516
    %v1533 = vpack.c.b16 %v1526, %v1525
    %v1534 = vpack.c.b16 %v1528, %v1527
    %v1535 = vpack.c.b16 %v1530, %v1529
    %v1536 = vpack.c.b16 %v1532, %v1531
    %v1542 = vsel %vm55, %v1507, 0
    %1544 = vmatpush.bf16.msra.mxu0 0
    %1545 = vmatpush.bf16.msra.mxu0 0
    %1546 = vmatpush.bf16.msra.mxu0 0
    %1547 = vmatpush.bf16.msra.mxu0 0
    %1548 = vmatpush.bf16.msra.mxu0 %v1536
    %1549 = vmatpush.bf16.msra.mxu0 %v1535
    %1550 = vmatpush.bf16.msra.mxu0 %v1534
    %1551 = vmatpush.bf16.msra.mxu0 %v1533
    %1552 = vmatmul.bf16.gmra.mxu0 %v1542
    %v1553 = vpop.f32.mrf.mxu0
    %v1554 = vadd.f32 0.0, %v1553
    %v1555 = vpop.f32.mrf.mxu0
    %v1556 = vadd.f32 0.0, %v1555
    %1557 = vdwg.mxu0
    %v1558 = vadd.f32 %v931, %v1554
    %v1559 = vadd.f32 %v932, %v1556
    %s1560 = scalar_lea.vmem %s2, 1
    %v1561 = vld [vmem:[%s1560] sm:$0x1]
    %v1562 = vmul.f32 %v1558, %v1558
    %v1563 = vmul.f32 %v1559, %v1559
    %v1564 = vsel %vm55, %v1562, 0.0
    %1565 = vadd.xlane.f32.xlu0 %v1564
    %v1566 = vpop.xlane.xlu0 %1565
    %v1567 = vsel %vm55, %v1563, 0.0
    %1568 = vadd.xlane.f32.xlu0 %v1567
    %v1569 = vpop.xlane.xlu0 %1568
    %v1570 = vmul.f32 %v1566, %v68
    %v1571 = vmul.f32 %v1569, %v68
    %v1572 = vadd.f32 %v1570, 1e-05
    %v1573 = vadd.f32 %v1571, 1e-05
    %v1574 = vrsqrt.pop %v1572
    %v1575 = vmul.f32 %v1574, %v1572
    %v1576 = vmul.f32 %v1575, %v1574
    %v1577 = vmul.f32 0.5, %v1576
    %v1578 = vsub.f32 1.5, %v1577
    %v1579 = vmul.f32 %v1574, %v1578
    %vm1580 = vweird.f32 %v1572
    %vm1581 = vweird.f32 %v1574
    %vm1582 = vmor %vm1580, %vm1581
    %v1583 = vsel %vm1582, %v1574, %v1579
    %v1584 = vrsqrt.pop %v1573
    %v1585 = vmul.f32 %v1584, %v1573
    %v1586 = vmul.f32 %v1585, %v1584
    %v1587 = vmul.f32 0.5, %v1586
    %v1588 = vsub.f32 1.5, %v1587
    %v1589 = vmul.f32 %v1584, %v1588
    %vm1590 = vweird.f32 %v1573
    %vm1591 = vweird.f32 %v1584
    %vm1592 = vmor %vm1590, %vm1591
    %v1593 = vsel %vm1592, %v1584, %v1589
    %v1594 = vmul.f32 %v1558, %v1583
    %v1595 = vmul.f32 %v1559, %v1593
    %v1597 = vperm.slane %v1561, 0
    %v1599 = vmul.f32 %v1594, %v1597
    %v1600 = vmul.f32 %v1595, %v1597
    %v1601 = vpack.c.bf16 %v1600, %v1599
    %s1602 = scalar_lea.vmem %s5, 64
    %v1603 = vld [vmem:[%s1602] sm:$0xff]
    %v1604 = vld [vmem:[%s1602 + $0x8] sm:$0xff]
    %v1605 = vld [vmem:[%s1602 + $0x10] sm:$0xff]
    %v1606 = vld [vmem:[%s1602 + $0x18] sm:$0xff]
    %v1607 = vld [vmem:[%s1602 + $0x20] sm:$0xff]
    %v1608 = vld [vmem:[%s1602 + $0x28] sm:$0xff]
    %v1609 = vld [vmem:[%s1602 + $0x30] sm:$0xff]
    %v1610 = vld [vmem:[%s1602 + $0x38] sm:$0xff]
    %v1619 = vunpack.c.l.b16 %v1603
    %v1620 = vunpack.c.h.b16 %v1603
    %v1621 = vunpack.c.l.b16 %v1604
    %v1622 = vunpack.c.h.b16 %v1604
    %v1623 = vunpack.c.l.b16 %v1605
    %v1624 = vunpack.c.h.b16 %v1605
    %v1625 = vunpack.c.l.b16 %v1606
    %v1626 = vunpack.c.h.b16 %v1606
    %v1627 = vunpack.c.l.b16 %v1607
    %v1628 = vunpack.c.h.b16 %v1607
    %v1629 = vunpack.c.l.b16 %v1608
    %v1630 = vunpack.c.h.b16 %v1608
    %v1631 = vunpack.c.l.b16 %v1609
    %v1632 = vunpack.c.h.b16 %v1609
    %v1633 = vunpack.c.l.b16 %v1610
    %v1634 = vunpack.c.h.b16 %v1610
    %v1635 = vpack.c.b16 %v1621, %v1619
    %v1636 = vpack.c.b16 %v1622, %v1620
    %v1637 = vpack.c.b16 %v1625, %v1623
    %v1638 = vpack.c.b16 %v1626, %v1624
    %v1639 = vpack.c.b16 %v1629, %v1627
    %v1640 = vpack.c.b16 %v1630, %v1628
    %v1641 = vpack.c.b16 %v1633, %v1631
    %v1642 = vpack.c.b16 %v1634, %v1632
    %v1652 = vsel %vm55, %v1601, 0
    %1654 = vmatpush.bf16.msra.mxu0 0
    %1655 = vmatpush.bf16.msra.mxu0 0
    %1656 = vmatpush.bf16.msra.mxu0 0
    %1657 = vmatpush.bf16.msra.mxu0 0
    %1658 = vmatpush.bf16.msra.mxu0 %v1641
    %1659 = vmatpush.bf16.msra.mxu0 %v1639
    %1660 = vmatpush.bf16.msra.mxu0 %v1637
    %1661 = vmatpush.bf16.msra.mxu0 %v1635
    %1662 = vmatmul.bf16.gmra.mxu0 %v1652
    %v1663 = vpop.f32.mrf.mxu0
    %v1664 = vadd.f32 0.0, %v1663
    %v1665 = vpop.f32.mrf.mxu0
    %v1666 = vadd.f32 0.0, %v1665
    %1667 = vdwg.mxu0
    %1668 = vmatpush.bf16.msra.mxu0 0
    %1669 = vmatpush.bf16.msra.mxu0 0
    %1670 = vmatpush.bf16.msra.mxu0 0
    %1671 = vmatpush.bf16.msra.mxu0 0
    %1672 = vmatpush.bf16.msra.mxu0 %v1642
    %1673 = vmatpush.bf16.msra.mxu0 %v1640
    %1674 = vmatpush.bf16.msra.mxu0 %v1638
    %1675 = vmatpush.bf16.msra.mxu0 %v1636
    %1676 = vmatmul.bf16.gmra.mxu0 %v1652
    %v1677 = vpop.f32.mrf.mxu0
    %v1678 = vadd.f32 0.0, %v1677
    %v1679 = vpop.f32.mrf.mxu0
    %v1680 = vadd.f32 0.0, %v1679
    %1681 = vdwg.mxu0
    %v1682 = vxor.u32 %v1664, 2147483648
    %v1683 = vxor.u32 %v1666, 2147483648
    %v1684 = vmul.f32 %v1682, 1.442695
    %v1685 = vpow.pop %v1684
    %v1686 = vmul.f32 %v1683, 1.442695
    %v1687 = vpow.pop %v1686
    %v1688 = vadd.f32 %v1685, 1.0
    %v1689 = vadd.f32 %v1687, 1.0
    %v1690 = vrcp.pop %v1688
    %v1691 = vmul.f32 %v1688, %v1690
    %v1692 = vsub.f32 1.0, %v1691
    %v1693 = vmul.f32 %v1690, %v1692
    %v1694 = vadd.f32 %v1690, %v1693
    %vm1695 = vweird.f32 %v1688
    %vm1696 = vweird.f32 %v1690
    %vm1697 = vmor %vm1695, %vm1696
    %v1698 = vsel %vm1697, %v1690, %v1694
    %v1699 = vand.u32 2147483647, %v1688
    %vm1700 = vcmp.eq.f32.partialorder %v1699, 8.507059e+37
    %v1701 = vand.u32 %v1688, 2147483648
    %v1702 = vor.u32 1.1754944e-38, %v1701
    %v1703 = vsel %vm1700, %v1702, %v1698
    %v1704 = vmul.f32 1.0, %v1703
    %v1705 = vrcp.pop %v1689
    %v1706 = vmul.f32 %v1689, %v1705
    %v1707 = vsub.f32 1.0, %v1706
    %v1708 = vmul.f32 %v1705, %v1707
    %v1709 = vadd.f32 %v1705, %v1708
    %vm1710 = vweird.f32 %v1689
    %vm1711 = vweird.f32 %v1705
    %vm1712 = vmor %vm1710, %vm1711
    %v1713 = vsel %vm1712, %v1705, %v1709
    %v1714 = vand.u32 2147483647, %v1689
    %vm1715 = vcmp.eq.f32.partialorder %v1714, 8.507059e+37
    %v1716 = vand.u32 %v1689, 2147483648
    %v1717 = vor.u32 1.1754944e-38, %v1716
    %v1718 = vsel %vm1715, %v1717, %v1713
    %v1719 = vmul.f32 1.0, %v1718
    %v1720 = vmul.f32 %v1664, %v1704
    %v1721 = vmul.f32 %v1666, %v1719
    %v1722 = vmul.f32 %v1720, %v1678
    %v1723 = vmul.f32 %v1721, %v1680
    %v1724 = vpack.c.bf16 %v1723, %v1722
    %s1725 = scalar_lea.vmem %s6, 64
    %v1726 = vld [vmem:[%s1725] sm:$0xf]
    %v1727 = vld [vmem:[%s1725 + $0x4] sm:$0xf]
    %v1728 = vld [vmem:[%s1725 + $0x8] sm:$0xf]
    %v1729 = vld [vmem:[%s1725 + $0xc] sm:$0xf]
    %v1730 = vld [vmem:[%s1725 + $0x10] sm:$0xf]
    %v1731 = vld [vmem:[%s1725 + $0x14] sm:$0xf]
    %v1732 = vld [vmem:[%s1725 + $0x18] sm:$0xf]
    %v1733 = vld [vmem:[%s1725 + $0x1c] sm:$0xf]
    %v1734 = vld [vmem:[%s1725 + $0x20] sm:$0xf]
    %v1735 = vld [vmem:[%s1725 + $0x24] sm:$0xf]
    %v1736 = vld [vmem:[%s1725 + $0x28] sm:$0xf]
    %v1737 = vld [vmem:[%s1725 + $0x2c] sm:$0xf]
    %v1738 = vld [vmem:[%s1725 + $0x30] sm:$0xf]
    %v1739 = vld [vmem:[%s1725 + $0x34] sm:$0xf]
    %v1740 = vld [vmem:[%s1725 + $0x38] sm:$0xf]
    %v1741 = vld [vmem:[%s1725 + $0x3c] sm:$0xf]
    %v1758 = vunpack.c.l.b16 %v1726
    %v1759 = vunpack.c.l.b16 %v1727
    %v1760 = vunpack.c.l.b16 %v1728
    %v1761 = vunpack.c.l.b16 %v1729
    %v1762 = vunpack.c.l.b16 %v1730
    %v1763 = vunpack.c.l.b16 %v1731
    %v1764 = vunpack.c.l.b16 %v1732
    %v1765 = vunpack.c.l.b16 %v1733
    %v1766 = vunpack.c.l.b16 %v1734
    %v1767 = vunpack.c.l.b16 %v1735
    %v1768 = vunpack.c.l.b16 %v1736
    %v1769 = vunpack.c.l.b16 %v1737
    %v1770 = vunpack.c.l.b16 %v1738
    %v1771 = vunpack.c.l.b16 %v1739
    %v1772 = vunpack.c.l.b16 %v1740
    %v1773 = vunpack.c.l.b16 %v1741
    %v1774 = vpack.c.b16 %v1759, %v1758
    %v1775 = vpack.c.b16 %v1761, %v1760
    %v1776 = vpack.c.b16 %v1763, %v1762
    %v1777 = vpack.c.b16 %v1765, %v1764
    %v1778 = vpack.c.b16 %v1767, %v1766
    %v1779 = vpack.c.b16 %v1769, %v1768
    %v1780 = vpack.c.b16 %v1771, %v1770
    %v1781 = vpack.c.b16 %v1773, %v1772
    %1790 = vmatpush.bf16.msra.mxu0 %v1781
    %1791 = vmatpush.bf16.msra.mxu0 %v1780
    %1792 = vmatpush.bf16.msra.mxu0 %v1779
    %1793 = vmatpush.bf16.msra.mxu0 %v1778
    %1794 = vmatpush.bf16.msra.mxu0 %v1777
    %1795 = vmatpush.bf16.msra.mxu0 %v1776
    %1796 = vmatpush.bf16.msra.mxu0 %v1775
    %1797 = vmatpush.bf16.msra.mxu0 %v1774
    %1798 = vmatmul.bf16.gmra.mxu0 %v1724
    %v1799 = vpop.f32.mrf.mxu0
    %v1800 = vadd.f32 0.0, %v1799
    %v1801 = vpop.f32.mrf.mxu0
    %v1802 = vadd.f32 0.0, %v1801
    %1803 = vdwg.mxu0
    %v1804 = vadd.f32 %v1558, %v1800
    %v1805 = vadd.f32 %v1559, %v1802
    %v1806 = vld [vmem:[%s7] sm:$0x1]
    %v1807 = vmul.f32 %v1804, %v1804
    %v1808 = vmul.f32 %v1805, %v1805
    %v1809 = vsel %vm55, %v1807, 0.0
    %1810 = vadd.xlane.f32.xlu0 %v1809
    %v1811 = vpop.xlane.xlu0 %1810
    %v1812 = vsel %vm55, %v1808, 0.0
    %1813 = vadd.xlane.f32.xlu0 %v1812
    %v1814 = vpop.xlane.xlu0 %1813
    %v1815 = vmul.f32 %v1811, %v68
    %v1816 = vmul.f32 %v1814, %v68
    %v1817 = vadd.f32 %v1815, 1e-05
    %v1818 = vadd.f32 %v1816, 1e-05
    %v1819 = vrsqrt.pop %v1817
    %v1820 = vmul.f32 %v1819, %v1817
    %v1821 = vmul.f32 %v1820, %v1819
    %v1822 = vmul.f32 0.5, %v1821
    %v1823 = vsub.f32 1.5, %v1822
    %v1824 = vmul.f32 %v1819, %v1823
    %vm1825 = vweird.f32 %v1817
    %vm1826 = vweird.f32 %v1819
    %vm1827 = vmor %vm1825, %vm1826
    %v1828 = vsel %vm1827, %v1819, %v1824
    %v1829 = vrsqrt.pop %v1818
    %v1830 = vmul.f32 %v1829, %v1818
    %v1831 = vmul.f32 %v1830, %v1829
    %v1832 = vmul.f32 0.5, %v1831
    %v1833 = vsub.f32 1.5, %v1832
    %v1834 = vmul.f32 %v1829, %v1833
    %vm1835 = vweird.f32 %v1818
    %vm1836 = vweird.f32 %v1829
    %vm1837 = vmor %vm1835, %vm1836
    %v1838 = vsel %vm1837, %v1829, %v1834
    %v1839 = vmul.f32 %v1804, %v1828
    %v1840 = vmul.f32 %v1805, %v1838
    %v1842 = vperm.slane %v1806, 0
    %v1844 = vmul.f32 %v1839, %v1842
    %v1845 = vmul.f32 %v1840, %v1842
    %v1846 = vpack.c.bf16 %v1845, %v1844
    %v1847 = vld [vmem:[%s8] sm:$0xff]
    %v1848 = vld [vmem:[%s8 + $0x8] sm:$0xff]
    %v1849 = vld [vmem:[%s8 + $0x10] sm:$0xff]
    %v1850 = vld [vmem:[%s8 + $0x18] sm:$0xff]
    %v1851 = vld [vmem:[%s8 + $0x20] sm:$0xff]
    %v1852 = vld [vmem:[%s8 + $0x28] sm:$0xff]
    %v1853 = vld [vmem:[%s8 + $0x30] sm:$0xff]
    %v1854 = vld [vmem:[%s8 + $0x38] sm:$0xff]
    %v1863 = vunpack.c.l.b16 %v1847
    %v1864 = vunpack.c.h.b16 %v1847
    %v1865 = vunpack.c.l.b16 %v1848
    %v1866 = vunpack.c.h.b16 %v1848
    %v1867 = vunpack.c.l.b16 %v1849
    %v1868 = vunpack.c.h.b16 %v1849
    %v1869 = vunpack.c.l.b16 %v1850
    %v1870 = vunpack.c.h.b16 %v1850
    %v1871 = vunpack.c.l.b16 %v1851
    %v1872 = vunpack.c.h.b16 %v1851
    %v1873 = vunpack.c.l.b16 %v1852
    %v1874 = vunpack.c.h.b16 %v1852
    %v1875 = vunpack.c.l.b16 %v1853
    %v1876 = vunpack.c.h.b16 %v1853
    %v1877 = vunpack.c.l.b16 %v1854
    %v1878 = vunpack.c.h.b16 %v1854
    %v1879 = vpack.c.b16 %v1865, %v1863
    %v1880 = vpack.c.b16 %v1866, %v1864
    %v1881 = vpack.c.b16 %v1869, %v1867
    %v1882 = vpack.c.b16 %v1870, %v1868
    %v1883 = vpack.c.b16 %v1873, %v1871
    %v1884 = vpack.c.b16 %v1874, %v1872
    %v1885 = vpack.c.b16 %v1877, %v1875
    %v1886 = vpack.c.b16 %v1878, %v1876
    %v1896 = vsel %vm55, %v1846, 0
    %1898 = vmatpush.bf16.msra.mxu0 0
    %1899 = vmatpush.bf16.msra.mxu0 0
    %1900 = vmatpush.bf16.msra.mxu0 0
    %1901 = vmatpush.bf16.msra.mxu0 0
    %1902 = vmatpush.bf16.msra.mxu0 %v1885
    %1903 = vmatpush.bf16.msra.mxu0 %v1883
    %1904 = vmatpush.bf16.msra.mxu0 %v1881
    %1905 = vmatpush.bf16.msra.mxu0 %v1879
    %1906 = vmatmul.bf16.gmra.mxu0 %v1896
    %v1907 = vpop.f32.mrf.mxu0
    %v1908 = vadd.f32 0.0, %v1907
    %v1909 = vpop.f32.mrf.mxu0
    %v1910 = vadd.f32 0.0, %v1909
    %1911 = vdwg.mxu0
    %1912 = vmatpush.bf16.msra.mxu0 0
    %1913 = vmatpush.bf16.msra.mxu0 0
    %1914 = vmatpush.bf16.msra.mxu0 0
    %1915 = vmatpush.bf16.msra.mxu0 0
    %1916 = vmatpush.bf16.msra.mxu0 %v1886
    %1917 = vmatpush.bf16.msra.mxu0 %v1884
    %1918 = vmatpush.bf16.msra.mxu0 %v1882
    %1919 = vmatpush.bf16.msra.mxu0 %v1880
    %1920 = vmatmul.bf16.gmra.mxu0 %v1896
    %v1921 = vpop.f32.mrf.mxu0
    %v1922 = vadd.f32 0.0, %v1921
    %v1923 = vpop.f32.mrf.mxu0
    %v1924 = vadd.f32 0.0, %v1923
    %1925 = vdwg.mxu0
    %1926 = vst [vmem:[#allocation3] sm:$0xff] %v1908
    %1927 = vst [vmem:[#allocation3 + $0x8] sm:$0xff] %v1922
    %1928 = vst [vmem:[#allocation3 + $0x10] sm:$0xff] %v1910
    %1929 = vst [vmem:[#allocation3 + $0x18] sm:$0xff] %v1924
    // Predicated region
    $region46: #{llama_forward.1} parent=1 // pred_check
      _
    $region47: #{llama_forward.1} parent=1 // pred_check_branch
      %1931 = sbr.rel (0) target = $region49
    $region48: #{llama_forward.1} parent=1 // pred_region
      %1933 = vsyncadd [#allocation4], 0
      %s1934 = sshll.u32 [#allocation3], 4
      %s1935 = int_to_ptr.vmem [resolvable:$true] %s1934
      %s1936 = sshll.u32 %s11, 4
      %s1937 = int_to_ptr.hbm [resolvable:$true] %s1936
      %1942 = dma.vmem_to_hbm [thread:$0]  %s1935, 512, %s1937, [#allocation4], 256, 256, 16
    $region49: #{llama_forward.1} parent=1 // pred_fallthru
      _
    // Predicated region
    $region50: #{llama_forward.1} parent=1 // pred_check
      _
    $region51: #{llama_forward.1} parent=1 // pred_check_branch
      %1944 = sbr.rel (0) target = $region53
    $region52: #{llama_forward.1} parent=1 // pred_region
      %1946 = dma.done [#allocation4], 512
    $region53: #{llama_forward.1} parent=1 // pred_fallthru
      _
    %1947 = vsyncpa [#allocation4], 1

</llo_original>
